<compile_context>
chip_gen: v6e
topology: v6e:2x2x1
jax: 0.10.0
libtpu: 0.0.40
codegen_flags: <defaults>
</compile_context>

<pallas_src>
import functools

import jax
import jax.numpy as jnp
from jax import lax
from jax.experimental import pallas as pl
from jax.experimental.pallas import tpu as pltpu


STEM_OUT_CHANNELS = {"small": 24, "medium": 24, "large": 32}


def _pick_tr(ho, p, lane_target=4096):
    """Largest row-group TR with TR | Ho, (TR % 8 == 0 or TR == Ho) and TR*P <= lane_target."""
    cap = max(1, lane_target // p)
    best = None
    for d in range(1, ho + 1):
        if ho % d == 0 and (d % 8 == 0 or d == ho) and d <= cap:
            best = d
    return best if best is not None else ho


# ---------------------------------------------------------------------------
# Pallas kernel: in-VMEM 2x2-tap "im2col"  ->  matmul  ->  BN affine  ->  SiLU
# ---------------------------------------------------------------------------
def _stem_kernel(x_ref, w_ref, s_ref, b_ref, o_ref, *, tm, p, tr, wo):
    # x_ref: [12, (TR+1)*P + 1] bf16  S2D window (TR output rows + 1 halo row, pitch P)
    # w_ref: [4, Cout, 12]      bf16  2x2-tap weights, tap k = dkr*2 + dkc
    # s_ref: [Cout, 1]          f32   BN scale  gamma / sqrt(var + eps)
    # b_ref: [Cout, 1]          f32   BN bias   beta - mean * scale
    # o_ref: [Cout, TR, Wo]     bf16
    x = x_ref[...]
    acc = jnp.dot(w_ref[0], x[:, 0:tm], preferred_element_type=jnp.float32)
    acc = acc + jnp.dot(w_ref[1], x[:, 1:tm + 1], preferred_element_type=jnp.float32)
    acc = acc + jnp.dot(w_ref[2], x[:, p:p + tm], preferred_element_type=jnp.float32)
    acc = acc + jnp.dot(w_ref[3], x[:, p + 1:p + 1 + tm], preferred_element_type=jnp.float32)
    y = acc * s_ref[...] + b_ref[...]          # BatchNorm2d (eval), f32
    y = y * jax.nn.sigmoid(y)                  # SiLU, f32
    y = y.astype(o_ref.dtype)                  # bf16 only at the store
    # Drop the single pad column per output row; junk lanes are never written to HBM.
    for t in range(tr):                        # static unroll
        o_ref[:, t, :] = y[:, t * p:t * p + wo]


def _stem_pallas(xg, w_taps, scale_col, bias_col, *, p, tr, wo, ho, out_dtype):
    n, grid_m, c12, tmb = xg.shape
    n_taps, cout, _ = w_taps.shape
    tm = tr * p

    kernel = functools.partial(_stem_kernel, tm=tm, p=p, tr=tr, wo=wo)

    out_itemsize = jnp.finfo(out_dtype).bits // 8
    flops = int(2 * n * grid_m * tm * cout * c12 * n_taps)
    transcendentals = int(n * grid_m * tm * cout)
    bytes_accessed = int(
        xg.size * xg.dtype.itemsize
        + w_taps.size * w_taps.dtype.itemsize
        + scale_col.size * 4 + bias_col.size * 4
        + n * cout * ho * wo * out_itemsize)

    return pl.pallas_call(
        kernel,
        out_shape=jax.ShapeDtypeStruct((n, cout, ho, wo), out_dtype),
        grid=(n, grid_m),
        in_specs=[
            pl.BlockSpec((None, None, c12, tmb), lambda b, i: (b, i, 0, 0)),
            pl.BlockSpec((n_taps, cout, c12), lambda b, i: (0, 0, 0)),   # resident
            pl.BlockSpec((cout, 1), lambda b, i: (0, 0)),                # resident
            pl.BlockSpec((cout, 1), lambda b, i: (0, 0)),                # resident
        ],
        out_specs=pl.BlockSpec((None, cout, tr, wo), lambda b, i: (b, 0, i, 0)),
        compiler_params=pltpu.CompilerParams(
            dimension_semantics=("parallel", "parallel"),
            vmem_limit_bytes=32 * 1024 * 1024),
        cost_estimate=pl.CostEstimate(flops=flops,
                                      transcendentals=transcendentals,
                                      bytes_accessed=bytes_accessed),
    )(xg, w_taps, scale_col, bias_col)


# ---------------------------------------------------------------------------
# EfficientNet forward (stem path) wrapper
# ---------------------------------------------------------------------------
class EfficientNetPallas:
    """conv_stem(3->Cout, 3x3, stride=2, pad=1, no bias) + BN(eval) + SiLU."""

    def __init__(self, variant: str = "small", seed: int = 0,
                 compute_dtype=jnp.bfloat16, out_dtype=jnp.bfloat16):
        self.cin = 3
        self.cout = STEM_OUT_CHANNELS[variant]
        self.compute_dtype = compute_dtype
        self.out_dtype = out_dtype

        key = jax.random.PRNGKey(seed)
        kw, kg, kb, km, kv = jax.random.split(key, 5)
        # Conv weight stored as [KH, KW, Cin, Cout] (HWIO).
        self.w = 0.1 * jax.random.normal(kw, (3, 3, self.cin, self.cout),
                                         dtype=jnp.float32)
        # BatchNorm2d params / running stats (eval-mode semantics).
        self.gamma = 1.0 + 0.05 * jax.random.normal(kg, (self.cout,), jnp.float32)
        self.beta = 0.05 * jax.random.normal(kb, (self.cout,), jnp.float32)
        self.running_mean = 0.05 * jax.random.normal(km, (self.cout,), jnp.float32)
        self.running_var = jnp.abs(
            1.0 + 0.05 * jax.random.normal(kv, (self.cout,), jnp.float32))
        self.eps = 1e-5

        # BN folded to per-channel f32 scale / bias (applied after the matmul in-kernel).
        scale = self.gamma / jnp.sqrt(self.running_var + self.eps)       # [Cout]
        self.scale_col = scale.reshape(self.cout, 1).astype(jnp.float32)
        self.bias_col = (self.beta - self.running_mean * scale
                         ).reshape(self.cout, 1).astype(jnp.float32)

        # Map the 3x3/s2 kernel onto a 2x2/s1 kernel over the space-to-depth input
        # (12 = 2*2*3 channels, channel = (sr*2+sc)*3 + ci).  kh = 2*dkr + sr - 1
        # (same for columns); invalid slots stay zero.
        wf = jnp.zeros((2, 2, 2, 2, 3, self.cout), jnp.float32)  # dkr,dkc,sr,sc,ci,co
        for dkr in range(2):
            for sr in range(2):
                kh = 2 * dkr + sr - 1
                if not 0 <= kh <= 2:
                    continue
                for dkc in range(2):
                    for sc in range(2):
                        kw_ = 2 * dkc + sc - 1
                        if not 0 <= kw_ <= 2:
                            continue
                        wf = wf.at[dkr, dkc, sr, sc].set(self.w[kh, kw_])
        # [4, Cout, 12]: per-tap LHS for out[c, m] += W_k @ X_k (raw weights, bf16).
        self.w_taps = (wf.reshape(2, 2, 12, self.cout)
                         .transpose(0, 1, 3, 2)
                         .reshape(4, self.cout, 12)
                         .astype(compute_dtype))

    def __call__(self, x_nchw, *, lane_target: int = 4096):
        n, c, h, w = x_nchw.shape
        assert c == self.cin
        # output size of a 3x3 / stride-2 / pad-1 conv (ceil -> odd H/W supported)
        ho, wo = -(-h // 2), -(-w // 2)
        hp, wp = 2 * ho, 2 * wo
        p = wo + 1                               # S2D row pitch (incl. left pad column)

        # ---- tiling: whole output rows per grid step --------------------------------
        tr = _pick_tr(ho, p, lane_target)        # TR | Ho and (TR % 8 == 0 or TR == Ho)
        grid_m = ho // tr
        tmb = (tr + 1) * p + 1                   # window length (halo row + 1 spare lane)

        # ---- glue (input-sized, bf16, fuses in XLA): space-to-depth + row groups -----
        x = x_nchw.astype(self.compute_dtype)
        if hp != h or wp != w:                   # odd H/W: zero row/col == conv padding
            x = jnp.pad(x, ((0, 0), (0, 0), (0, hp - h), (0, wp - w)))
        xs = x.reshape(n, 3, ho, 2, wo, 2).transpose(0, 3, 5, 1, 2, 4)
        xs = xs.reshape(n, 12, ho, wo)
        xs = jnp.pad(xs, ((0, 0), (0, 0), (1, 0), (1, 0)))   # top / left conv padding
        # tile i holds xs_pad rows [i*tr, i*tr + tr]  (tr + 1 rows: one shared halo row)
        row_idx = jnp.arange(grid_m)[:, None] * tr + jnp.arange(tr + 1)[None, :]
        xg = xs[:, :, row_idx, :]                             # [N, 12, grid_m, tr+1, P]
        xg = xg.transpose(0, 2, 1, 3, 4).reshape(n, grid_m, 12, (tr + 1) * p)
        xg = jnp.pad(xg, ((0, 0), (0, 0), (0, 0), (0, tmb - (tr + 1) * p)))

        # ---- hot path: fused Pallas kernel -> already [N, Cout, Ho, Wo], no crop ------
        out = _stem_pallas(xg, self.w_taps, self.scale_col, self.bias_col,
                           p=p, tr=tr, wo=wo, ho=ho, out_dtype=self.out_dtype)

        # stages: identity
        # TODO(synk): EfficientNetBuilder stages not reproducible (source not given).
        return out


if __name__ == "__main__":
    key = jax.random.PRNGKey(0)
    x = jax.random.normal(key, (2, 3, 16, 16), dtype=jnp.float32)  # NCHW like PyTorch

    model = EfficientNetPallas(variant="small", seed=0)
    y = jax.block_until_ready(jax.jit(lambda inp: model(inp))(x))
    assert y.shape == (2, 24, 8, 8), y.shape
    assert y.dtype == jnp.bfloat16, y.dtype

    # pure-JAX f32 reference of the same stem (conv + BN(eval) + SiLU), NCHW
    ref = lax.conv_general_dilated(
        x, model.w, window_strides=(2, 2), padding=((1, 1), (1, 1)),
        dimension_numbers=("NCHW", "HWIO", "NCHW"))
    scale = model.gamma / jnp.sqrt(model.running_var + model.eps)
    bias = model.beta - model.running_mean * scale
    ref = ref * scale[None, :, None, None] + bias[None, :, None, None]
    ref = ref * jax.nn.sigmoid(ref)

    yf = y.astype(jnp.float32)
    err = float(jnp.max(jnp.abs(yf - ref)))
    assert jnp.allclose(yf, ref, atol=6e-2, rtol=6e-2), f"mismatch, max abs err={err}"
    print("KERNEL_OK")
</pallas_src>

<mosaic_0001>
module attributes {stable_mosaic.version = 11 : i64} {
  func.func @_stem_kernel(%arg0: i32, %arg1: i32, %arg2: memref<1x1x12x82xbf16, #tpu.memory_space<vmem>>, %arg3: memref<4x24x12xbf16, #tpu.memory_space<vmem>>, %arg4: memref<24x1xf32, #tpu.memory_space<vmem>>, %arg5: memref<24x1xf32, #tpu.memory_space<vmem>>, %arg6: memref<1x24x8x8xbf16, #tpu.memory_space<vmem>>) attributes {dimension_semantics = [#tpu.dimension_semantics<parallel>, #tpu.dimension_semantics<parallel>], iteration_bounds = array<i64: 2, 1>, scalar_prefetch = 0 : i64, scratch_operands = 0 : i64, tpu.core_type = #tpu.core_type<tc>, window_params = [{transform_indices = @transform_0, window_bounds = array<i64: 1, 1, 12, 82>}, {pipeline_mode = #tpu.pipeline_mode<synchronous>, transform_indices = @transform_1, window_bounds = array<i64: 4, 24, 12>}, {pipeline_mode = #tpu.pipeline_mode<synchronous>, transform_indices = @transform_2, window_bounds = array<i64: 24, 1>}, {pipeline_mode = #tpu.pipeline_mode<synchronous>, transform_indices = @transform_3, window_bounds = array<i64: 24, 1>}, {transform_indices = @transform_4, window_bounds = array<i64: 1, 24, 8, 8>}]} {
    %c0 = arith.constant 0 : index
    %c0_0 = arith.constant 0 : index
    %c0_1 = arith.constant 0 : index
    %c0_2 = arith.constant 0 : index
    %0 = vector.load %arg2[%c0, %c0_0, %c0_1, %c0_2] : memref<1x1x12x82xbf16, #tpu.memory_space<vmem>>, vector<1x1x12x82xbf16>
    %1 = vector.shape_cast %0 : vector<1x1x12x82xbf16> to vector<12x82xbf16>
    %c0_3 = arith.constant 0 : index
    %c0_4 = arith.constant 0 : index
    %c0_5 = arith.constant 0 : index
    %2 = vector.load %arg3[%c0_3, %c0_4, %c0_5] : memref<4x24x12xbf16, #tpu.memory_space<vmem>>, vector<1x24x12xbf16>
    %3 = vector.shape_cast %2 : vector<1x24x12xbf16> to vector<24x12xbf16>
    %4 = vector.extract_strided_slice %1 {offsets = [0, 0], sizes = [12, 72], strides = [1, 1]} : vector<12x82xbf16> to vector<12x72xbf16>
    %cst = arith.constant dense<0.000000e+00> : vector<24x72xf32>
    %5 = tpu.matmul %3, %4, %cst {dimension_numbers = #tpu.dot_dimension_numbers<[1], [0], [0], [1], [0, 0, 1, 1], [], []>} : vector<24x12xbf16>, vector<12x72xbf16>, vector<24x72xf32> -> vector<24x72xf32>
    %c1 = arith.constant 1 : index
    %c0_6 = arith.constant 0 : index
    %c0_7 = arith.constant 0 : index
    %6 = vector.load %arg3[%c1, %c0_6, %c0_7] : memref<4x24x12xbf16, #tpu.memory_space<vmem>>, vector<1x24x12xbf16>
    %7 = vector.shape_cast %6 : vector<1x24x12xbf16> to vector<24x12xbf16>
    %8 = vector.extract_strided_slice %1 {offsets = [0, 1], sizes = [12, 72], strides = [1, 1]} : vector<12x82xbf16> to vector<12x72xbf16>
    %cst_8 = arith.constant dense<0.000000e+00> : vector<24x72xf32>
    %9 = tpu.matmul %7, %8, %cst_8 {dimension_numbers = #tpu.dot_dimension_numbers<[1], [0], [0], [1], [0, 0, 1, 1], [], []>} : vector<24x12xbf16>, vector<12x72xbf16>, vector<24x72xf32> -> vector<24x72xf32>
    %10 = arith.addf %5, %9 : vector<24x72xf32>
    %c2 = arith.constant 2 : index
    %c0_9 = arith.constant 0 : index
    %c0_10 = arith.constant 0 : index
    %11 = vector.load %arg3[%c2, %c0_9, %c0_10] : memref<4x24x12xbf16, #tpu.memory_space<vmem>>, vector<1x24x12xbf16>
    %12 = vector.shape_cast %11 : vector<1x24x12xbf16> to vector<24x12xbf16>
    %13 = vector.extract_strided_slice %1 {offsets = [0, 9], sizes = [12, 72], strides = [1, 1]} : vector<12x82xbf16> to vector<12x72xbf16>
    %cst_11 = arith.constant dense<0.000000e+00> : vector<24x72xf32>
    %14 = tpu.matmul %12, %13, %cst_11 {dimension_numbers = #tpu.dot_dimension_numbers<[1], [0], [0], [1], [0, 0, 1, 1], [], []>} : vector<24x12xbf16>, vector<12x72xbf16>, vector<24x72xf32> -> vector<24x72xf32>
    %15 = arith.addf %10, %14 : vector<24x72xf32>
    %c3 = arith.constant 3 : index
    %c0_12 = arith.constant 0 : index
    %c0_13 = arith.constant 0 : index
    %16 = vector.load %arg3[%c3, %c0_12, %c0_13] : memref<4x24x12xbf16, #tpu.memory_space<vmem>>, vector<1x24x12xbf16>
    %17 = vector.shape_cast %16 : vector<1x24x12xbf16> to vector<24x12xbf16>
    %18 = vector.extract_strided_slice %1 {offsets = [0, 10], sizes = [12, 72], strides = [1, 1]} : vector<12x82xbf16> to vector<12x72xbf16>
    %cst_14 = arith.constant dense<0.000000e+00> : vector<24x72xf32>
    %19 = tpu.matmul %17, %18, %cst_14 {dimension_numbers = #tpu.dot_dimension_numbers<[1], [0], [0], [1], [0, 0, 1, 1], [], []>} : vector<24x12xbf16>, vector<12x72xbf16>, vector<24x72xf32> -> vector<24x72xf32>
    %20 = arith.addf %15, %19 : vector<24x72xf32>
    %c0_15 = arith.constant 0 : index
    %c0_16 = arith.constant 0 : index
    %21 = vector.load %arg4[%c0_15, %c0_16] : memref<24x1xf32, #tpu.memory_space<vmem>>, vector<24x1xf32>
    %22 = vector.broadcast %21 : vector<24x1xf32> to vector<24x72xf32>
    %23 = arith.mulf %20, %22 : vector<24x72xf32>
    %c0_17 = arith.constant 0 : index
    %c0_18 = arith.constant 0 : index
    %24 = vector.load %arg5[%c0_17, %c0_18] : memref<24x1xf32, #tpu.memory_space<vmem>>, vector<24x1xf32>
    %25 = vector.broadcast %24 : vector<24x1xf32> to vector<24x72xf32>
    %26 = arith.addf %23, %25 : vector<24x72xf32>
    %27 = arith.negf %26 : vector<24x72xf32>
    %28 = math.exp %27 : vector<24x72xf32>
    %cst_19 = arith.constant 1.000000e+00 : f32
    %29 = vector.broadcast %cst_19 : f32 to vector<24x72xf32>
    %30 = arith.addf %29, %28 : vector<24x72xf32>
    %31 = arith.divf %29, %30 : vector<24x72xf32>
    %32 = arith.mulf %26, %31 : vector<24x72xf32>
    %33 = arith.truncf %32 : vector<24x72xf32> to vector<24x72xbf16>
    %34 = vector.extract_strided_slice %33 {offsets = [0, 0], sizes = [24, 8], strides = [1, 1]} : vector<24x72xbf16> to vector<24x8xbf16>
    %c0_20 = arith.constant 0 : index
    %c0_21 = arith.constant 0 : index
    %c0_22 = arith.constant 0 : index
    %c0_23 = arith.constant 0 : index
    %35 = vector.load %arg6[%c0_20, %c0_21, %c0_22, %c0_23] : memref<1x24x8x8xbf16, #tpu.memory_space<vmem>>, vector<1x24x1x8xbf16>
    %36 = vector.shape_cast %35 : vector<1x24x1x8xbf16> to vector<24x8xbf16>
    %37 = vector.shape_cast %34 : vector<24x8xbf16> to vector<1x24x1x8xbf16>
    tpu.vector_store %arg6[%c0_20, %c0_21, %c0_22, %c0_23], %37 {strides = array<i32>} : memref<1x24x8x8xbf16, #tpu.memory_space<vmem>>, vector<1x24x1x8xbf16>,
    %38 = vector.extract_strided_slice %33 {offsets = [0, 9], sizes = [24, 8], strides = [1, 1]} : vector<24x72xbf16> to vector<24x8xbf16>
    %c0_24 = arith.constant 0 : index
    %c0_25 = arith.constant 0 : index
    %c1_26 = arith.constant 1 : index
    %c0_27 = arith.constant 0 : index
    %39 = vector.load %arg6[%c0_24, %c0_25, %c1_26, %c0_27] : memref<1x24x8x8xbf16, #tpu.memory_space<vmem>>, vector<1x24x1x8xbf16>
    %40 = vector.shape_cast %39 : vector<1x24x1x8xbf16> to vector<24x8xbf16>
    %41 = vector.shape_cast %38 : vector<24x8xbf16> to vector<1x24x1x8xbf16>
    tpu.vector_store %arg6[%c0_24, %c0_25, %c1_26, %c0_27], %41 {strides = array<i32>} : memref<1x24x8x8xbf16, #tpu.memory_space<vmem>>, vector<1x24x1x8xbf16>,
    %42 = vector.extract_strided_slice %33 {offsets = [0, 18], sizes = [24, 8], strides = [1, 1]} : vector<24x72xbf16> to vector<24x8xbf16>
    %c0_28 = arith.constant 0 : index
    %c0_29 = arith.constant 0 : index
    %c2_30 = arith.constant 2 : index
    %c0_31 = arith.constant 0 : index
    %43 = vector.load %arg6[%c0_28, %c0_29, %c2_30, %c0_31] : memref<1x24x8x8xbf16, #tpu.memory_space<vmem>>, vector<1x24x1x8xbf16>
    %44 = vector.shape_cast %43 : vector<1x24x1x8xbf16> to vector<24x8xbf16>
    %45 = vector.shape_cast %42 : vector<24x8xbf16> to vector<1x24x1x8xbf16>
    tpu.vector_store %arg6[%c0_28, %c0_29, %c2_30, %c0_31], %45 {strides = array<i32>} : memref<1x24x8x8xbf16, #tpu.memory_space<vmem>>, vector<1x24x1x8xbf16>,
    %46 = vector.extract_strided_slice %33 {offsets = [0, 27], sizes = [24, 8], strides = [1, 1]} : vector<24x72xbf16> to vector<24x8xbf16>
    %c0_32 = arith.constant 0 : index
    %c0_33 = arith.constant 0 : index
    %c3_34 = arith.constant 3 : index
    %c0_35 = arith.constant 0 : index
    %47 = vector.load %arg6[%c0_32, %c0_33, %c3_34, %c0_35] : memref<1x24x8x8xbf16, #tpu.memory_space<vmem>>, vector<1x24x1x8xbf16>
    %48 = vector.shape_cast %47 : vector<1x24x1x8xbf16> to vector<24x8xbf16>
    %49 = vector.shape_cast %46 : vector<24x8xbf16> to vector<1x24x1x8xbf16>
    tpu.vector_store %arg6[%c0_32, %c0_33, %c3_34, %c0_35], %49 {strides = array<i32>} : memref<1x24x8x8xbf16, #tpu.memory_space<vmem>>, vector<1x24x1x8xbf16>,
    %50 = vector.extract_strided_slice %33 {offsets = [0, 36], sizes = [24, 8], strides = [1, 1]} : vector<24x72xbf16> to vector<24x8xbf16>
    %c0_36 = arith.constant 0 : index
    %c0_37 = arith.constant 0 : index
    %c4 = arith.constant 4 : index
    %c0_38 = arith.constant 0 : index
    %51 = vector.load %arg6[%c0_36, %c0_37, %c4, %c0_38] : memref<1x24x8x8xbf16, #tpu.memory_space<vmem>>, vector<1x24x1x8xbf16>
    %52 = vector.shape_cast %51 : vector<1x24x1x8xbf16> to vector<24x8xbf16>
    %53 = vector.shape_cast %50 : vector<24x8xbf16> to vector<1x24x1x8xbf16>
    tpu.vector_store %arg6[%c0_36, %c0_37, %c4, %c0_38], %53 {strides = array<i32>} : memref<1x24x8x8xbf16, #tpu.memory_space<vmem>>, vector<1x24x1x8xbf16>,
    %54 = vector.extract_strided_slice %33 {offsets = [0, 45], sizes = [24, 8], strides = [1, 1]} : vector<24x72xbf16> to vector<24x8xbf16>
    %c0_39 = arith.constant 0 : index
    %c0_40 = arith.constant 0 : index
    %c5 = arith.constant 5 : index
    %c0_41 = arith.constant 0 : index
    %55 = vector.load %arg6[%c0_39, %c0_40, %c5, %c0_41] : memref<1x24x8x8xbf16, #tpu.memory_space<vmem>>, vector<1x24x1x8xbf16>
    %56 = vector.shape_cast %55 : vector<1x24x1x8xbf16> to vector<24x8xbf16>
    %57 = vector.shape_cast %54 : vector<24x8xbf16> to vector<1x24x1x8xbf16>
    tpu.vector_store %arg6[%c0_39, %c0_40, %c5, %c0_41], %57 {strides = array<i32>} : memref<1x24x8x8xbf16, #tpu.memory_space<vmem>>, vector<1x24x1x8xbf16>,
    %58 = vector.extract_strided_slice %33 {offsets = [0, 54], sizes = [24, 8], strides = [1, 1]} : vector<24x72xbf16> to vector<24x8xbf16>
    %c0_42 = arith.constant 0 : index
    %c0_43 = arith.constant 0 : index
    %c6 = arith.constant 6 : index
    %c0_44 = arith.constant 0 : index
    %59 = vector.load %arg6[%c0_42, %c0_43, %c6, %c0_44] : memref<1x24x8x8xbf16, #tpu.memory_space<vmem>>, vector<1x24x1x8xbf16>
    %60 = vector.shape_cast %59 : vector<1x24x1x8xbf16> to vector<24x8xbf16>
    %61 = vector.shape_cast %58 : vector<24x8xbf16> to vector<1x24x1x8xbf16>
    tpu.vector_store %arg6[%c0_42, %c0_43, %c6, %c0_44], %61 {strides = array<i32>} : memref<1x24x8x8xbf16, #tpu.memory_space<vmem>>, vector<1x24x1x8xbf16>,
    %62 = vector.extract_strided_slice %33 {offsets = [0, 63], sizes = [24, 8], strides = [1, 1]} : vector<24x72xbf16> to vector<24x8xbf16>
    %c0_45 = arith.constant 0 : index
    %c0_46 = arith.constant 0 : index
    %c7 = arith.constant 7 : index
    %c0_47 = arith.constant 0 : index
    %63 = vector.load %arg6[%c0_45, %c0_46, %c7, %c0_47] : memref<1x24x8x8xbf16, #tpu.memory_space<vmem>>, vector<1x24x1x8xbf16>
    %64 = vector.shape_cast %63 : vector<1x24x1x8xbf16> to vector<24x8xbf16>
    %65 = vector.shape_cast %62 : vector<24x8xbf16> to vector<1x24x1x8xbf16>
    tpu.vector_store %arg6[%c0_45, %c0_46, %c7, %c0_47], %65 {strides = array<i32>} : memref<1x24x8x8xbf16, #tpu.memory_space<vmem>>, vector<1x24x1x8xbf16>,
    return
  }
  func.func @transform_0(%arg0: i32, %arg1: i32) -> (i32, i32, i32, i32) {
    %c0_i32 = arith.constant 0 : i32
    %c0_i32_0 = arith.constant 0 : i32
    %c0_i32_1 = arith.constant 0 : i32
    return %arg0, %arg1, %c0_i32, %c0_i32_0 : i32, i32, i32, i32
  }
  func.func @transform_1(%arg0: i32, %arg1: i32) -> (i32, i32, i32) {
    %c0_i32 = arith.constant 0 : i32
    %c0_i32_0 = arith.constant 0 : i32
    %c0_i32_1 = arith.constant 0 : i32
    %c0_i32_2 = arith.constant 0 : i32
    return %c0_i32, %c0_i32_0, %c0_i32_1 : i32, i32, i32
  }
  func.func @transform_2(%arg0: i32, %arg1: i32) -> (i32, i32) {
    %c0_i32 = arith.constant 0 : i32
    %c0_i32_0 = arith.constant 0 : i32
    %c0_i32_1 = arith.constant 0 : i32
    return %c0_i32, %c0_i32_0 : i32, i32
  }
  func.func @transform_3(%arg0: i32, %arg1: i32) -> (i32, i32) {
    %c0_i32 = arith.constant 0 : i32
    %c0_i32_0 = arith.constant 0 : i32
    %c0_i32_1 = arith.constant 0 : i32
    return %c0_i32, %c0_i32_0 : i32, i32
  }
  func.func @transform_4(%arg0: i32, %arg1: i32) -> (i32, i32, i32, i32) {
    %c0_i32 = arith.constant 0 : i32
    %c0_i32_0 = arith.constant 0 : i32
    %c0_i32_1 = arith.constant 0 : i32
    return %arg0, %c0_i32, %arg1, %c0_i32_0 : i32, i32, i32, i32
  }
}

</mosaic_0001>

<llo_original>
// kernel: _lambda_.1
$region0: #{_lambda_.1}
  #allocation0 [shape = 'u32[]', space=smem, size = 0x4, offset = 0x4, fixed_abs, tag = 'smem constant byte address 0x4 - core index']
  #allocation1 [shape = 'u32[144,128]{1,0:T(1,128)}', space=vmem, size = 0x12000, scoped, tag = 'internal scratch']
  %s0 = inlined_call_operand.vmem [shape: bf16[2,1,12,82], index: 0, kind: input, shape index: {}]
  %s1 = inlined_call_operand.vmem [shape: bf16[4,24,12], index: 1, kind: input, shape index: {}]
  %s2 = inlined_call_operand.vmem [shape: f32[24,1], index: 2, kind: input, shape index: {}]
  %s3 = inlined_call_operand.vmem [shape: f32[24,1], index: 3, kind: input, shape index: {}]
  %s4 = inlined_call_operand.vmem [shape: bf16[2,24,8,8], index: 4, kind: output, shape index: {}]
  %s5 = sld [smem:[#allocation0]]
  $region49: #{_lambda_.1} parent=0
    _
  %s7 = ssub.s32 1, %s5
  %s8 = scalar_select 0, %s7, %s5
  loop: start=0, step=1, limit=4
  $region2: #{_lambda_.1} parent=0 // loop_pre_header
    _
  $region3: #{_lambda_.1} parent=0 // loop_header
    %s10 = sphi 0, %s14
    %p11 = scmp.ge.s32.totalorder %s10, 4
    %s17 = sphi 0, %s29
    %s18 = sphi 0, %s25
    %s19 = sphi 0, %s17
    %s20 = sphi 0, %s18
    %s21 = sphi 0, %s19
    %s22 = sphi 0, %s20
    %s34 = sphi 0, %s36
    %s37 = sphi 0, %s34
    %s38 = sphi 0, %s37
    %s54 = sphi 0, %s38
    %s58 = sphi 0, %s58
    %s60 = sphi 0, %s58
    %s61 = sphi 0, %s60
    %s75 = sphi 0, %s61
    %s79 = sphi 0, %s79
    %s81 = sphi 0, %s79
    %s82 = sphi 0, %s81
    %s96 = sphi 0, %s82
    %s100 = sphi 0, %s100
    %s102 = sphi 0, %s100
    %s103 = sphi 0, %s102
    %s117 = sphi 0, %s103
    %s125 = sphi 0, %s127
    %s128 = sphi 0, %s125
    %s129 = sphi 0, %s128
    %s145 = sphi 0, %s129
  $region4: #{_lambda_.1} parent=0 // loop_header_branch
    %13 = sbr.rel (%p11) target = $region8
  $region5: #{_lambda_.1} parent=0 // loop_body
    %s15 = ssub.s32 %s10, 1
    %s16 = ssub.s32 %s10, 2
    %s23 = sadd.s32 1, %s18
    %p24 = scmp.ge.s32.totalorder %s23, 1
    %s25 = scalar_select %p24, 0, %s23
    %s26 = sadd.s32 1, %s17
    %s27 = scalar_select %p24, %s26, %s17
    %p28 = scmp.ge.s32.totalorder %s27, 2
    %s29 = scalar_select %p28, 0, %s27
    %s30 = ssub.s32 %s17, %s29
    %s31 = ssub.s32 %s18, %s25
    %s32 = sor.u32 %s30, %s31
    %p33 = scmp.eq.s32.totalorder %s32, 0
    %s35 = sadd.s32 %s34, 1
    %s36 = scalar_select %p33, %s34, %s35
    %p39 = pneg %p33
    %p40 = scmp.eq.s32.totalorder %s10, 1
    %p41 = por %p39, %p40
    %p42 = scmp.ne.s32.totalorder %s34, %s37
    %p43 = scmp.eq.s32.totalorder %s10, 0
    %p44 = por %p42, %p43
    %p45 = scmp.ne.s32.totalorder %s34, %s37
    %p46 = scmp.eq.s32.totalorder %s15, 1
    %p47 = por %p45, %p46
    %p48 = scmp.ne.s32.totalorder %s37, %s38
    %p49 = scmp.eq.s32.totalorder %s15, 0
    %p50 = por %p48, %p49
    %p51 = scmp.ne.s32.totalorder %s37, %s38
    %p52 = scmp.eq.s32.totalorder %s16, 1
    %p53 = por %p51, %p52
    %p55 = scmp.ne.s32.totalorder %s38, %s54
    %p56 = scmp.eq.s32.totalorder %s16, 0
    %p57 = por %p55, %p56
    %s59 = sadd.s32 %s58, 1
    %p62 = scmp.eq.s32.totalorder %s10, 1
    %p63 = scmp.ne.s32.totalorder %s58, %s60
    %p64 = scmp.eq.s32.totalorder %s10, 0
    %p65 = por %p63, %p64
    %p66 = scmp.ne.s32.totalorder %s58, %s60
    %p67 = scmp.eq.s32.totalorder %s15, 1
    %p68 = por %p66, %p67
    %p69 = scmp.ne.s32.totalorder %s60, %s61
    %p70 = scmp.eq.s32.totalorder %s15, 0
    %p71 = por %p69, %p70
    %p72 = scmp.ne.s32.totalorder %s60, %s61
    %p73 = scmp.eq.s32.totalorder %s16, 1
    %p74 = por %p72, %p73
    %p76 = scmp.ne.s32.totalorder %s61, %s75
    %p77 = scmp.eq.s32.totalorder %s16, 0
    %p78 = por %p76, %p77
    %s80 = sadd.s32 %s79, 1
    %p83 = scmp.eq.s32.totalorder %s10, 1
    %p84 = scmp.ne.s32.totalorder %s79, %s81
    %p85 = scmp.eq.s32.totalorder %s10, 0
    %p86 = por %p84, %p85
    %p87 = scmp.ne.s32.totalorder %s79, %s81
    %p88 = scmp.eq.s32.totalorder %s15, 1
    %p89 = por %p87, %p88
    %p90 = scmp.ne.s32.totalorder %s81, %s82
    %p91 = scmp.eq.s32.totalorder %s15, 0
    %p92 = por %p90, %p91
    %p93 = scmp.ne.s32.totalorder %s81, %s82
    %p94 = scmp.eq.s32.totalorder %s16, 1
    %p95 = por %p93, %p94
    %p97 = scmp.ne.s32.totalorder %s82, %s96
    %p98 = scmp.eq.s32.totalorder %s16, 0
    %p99 = por %p97, %p98
    %s101 = sadd.s32 %s100, 1
    %p104 = scmp.eq.s32.totalorder %s10, 1
    %p105 = scmp.ne.s32.totalorder %s100, %s102
    %p106 = scmp.eq.s32.totalorder %s10, 0
    %p107 = por %p105, %p106
    %p108 = scmp.ne.s32.totalorder %s100, %s102
    %p109 = scmp.eq.s32.totalorder %s15, 1
    %p110 = por %p108, %p109
    %p111 = scmp.ne.s32.totalorder %s102, %s103
    %p112 = scmp.eq.s32.totalorder %s15, 0
    %p113 = por %p111, %p112
    %p114 = scmp.ne.s32.totalorder %s102, %s103
    %p115 = scmp.eq.s32.totalorder %s16, 1
    %p116 = por %p114, %p115
    %p118 = scmp.ne.s32.totalorder %s103, %s117
    %p119 = scmp.eq.s32.totalorder %s16, 0
    %p120 = por %p118, %p119
    %s121 = ssub.s32 %s17, %s29
    %s122 = ssub.s32 %s18, %s25
    %s123 = sor.u32 %s121, %s122
    %p124 = scmp.eq.s32.totalorder %s123, 0
    %s126 = sadd.s32 %s125, 1
    %s127 = scalar_select %p124, %s125, %s126
    %p130 = pneg %p124
    %p131 = scmp.eq.s32.totalorder %s10, 1
    %p132 = por %p130, %p131
    %p133 = scmp.ne.s32.totalorder %s125, %s128
    %p134 = scmp.eq.s32.totalorder %s10, 0
    %p135 = por %p133, %p134
    %p136 = scmp.ne.s32.totalorder %s125, %s128
    %p137 = scmp.eq.s32.totalorder %s15, 1
    %p138 = por %p136, %p137
    %p139 = scmp.ne.s32.totalorder %s128, %s129
    %p140 = scmp.eq.s32.totalorder %s15, 0
    %p141 = por %p139, %p140
    %p142 = scmp.ne.s32.totalorder %s128, %s129
    %p143 = scmp.eq.s32.totalorder %s16, 1
    %p144 = por %p142, %p143
    %p146 = scmp.ne.s32.totalorder %s129, %s145
    %p147 = scmp.eq.s32.totalorder %s16, 0
    %p148 = por %p146, %p147
    %p149 = scmp.le.s32.totalorder 1, %s10
    %p150 = scmp.lt.s32.totalorder %s10, 3
    %p151 = pnand %p149, %p150
    %p152 = pneg %p151
    // Predicated region
    $region9: #{_lambda_.1} parent=5 // pred_check
      _
    $region10: #{_lambda_.1} parent=5 // pred_check_branch
      %154 = sbr.rel (%p151) target = $region12
    $region11: #{_lambda_.1} parent=5 // pred_region
      %s155 = ssub.s32 %s10, 1
      // Predicated region
      $region13: #{_lambda_.1} parent=11 // pred_check
        %p156 = pneg %p71
      $region14: #{_lambda_.1} parent=11 // pred_check_branch
        %158 = sbr.rel (%p156) target = $region16
      $region15: #{_lambda_.1} parent=11 // pred_region
        _
      $region16: #{_lambda_.1} parent=11 // pred_fallthru
        _
      // Predicated region
      $region17: #{_lambda_.1} parent=11 // pred_check
        %p159 = pneg %p92
      $region18: #{_lambda_.1} parent=11 // pred_check_branch
        %161 = sbr.rel (%p159) target = $region20
      $region19: #{_lambda_.1} parent=11 // pred_region
        _
      $region20: #{_lambda_.1} parent=11 // pred_fallthru
        _
      // Predicated region
      $region21: #{_lambda_.1} parent=11 // pred_check
        %p162 = pneg %p113
      $region22: #{_lambda_.1} parent=11 // pred_check_branch
        %164 = sbr.rel (%p162) target = $region24
      $region23: #{_lambda_.1} parent=11 // pred_region
        _
      $region24: #{_lambda_.1} parent=11 // pred_fallthru
        _
    $region12: #{_lambda_.1} parent=5 // pred_fallthru
      _
    %p165 = scmp.lt.s32.totalorder %s10, 2
    // Predicated region
    $region25: #{_lambda_.1} parent=5 // pred_check
      %p166 = pneg %p165
    $region26: #{_lambda_.1} parent=5 // pred_check_branch
      %168 = sbr.rel (%p166) target = $region28
    $region27: #{_lambda_.1} parent=5 // pred_region
      // Predicated region
      $region29: #{_lambda_.1} parent=27 // pred_check
        %p169 = pneg %p44
      $region30: #{_lambda_.1} parent=27 // pred_check_branch
        %171 = sbr.rel (%p169) target = $region32
      $region31: #{_lambda_.1} parent=27 // pred_region
        %p172 = scmp.lt.s32.totalorder %s17, 1
        %s173 = scalar_select %p172, %s17, 1
        %p174 = scmp.lt.s32.totalorder %s18, 0
        %s175 = scalar_select %p174, %s18, 0
        %s176 = smul.addr %s175, 2
        %s177 = smul.addr %s173, 2
        %s178 = sadd.s32 %s176, %s177
        %s179 = smul.addr %s178, 4
        %s180 = scalar_lea.vmem %s0, %s179
      $region32: #{_lambda_.1} parent=27 // pred_fallthru
        _
    $region28: #{_lambda_.1} parent=5 // pred_fallthru
      _
    %p181 = scmp.le.s32.totalorder 1, %s10
    %p182 = scmp.lt.s32.totalorder %s10, 3
    %p183 = pnand %p181, %p182
    %p184 = pneg %p183
    // Predicated region
    $region33: #{_lambda_.1} parent=5 // pred_check
      _
    $region34: #{_lambda_.1} parent=5 // pred_check_branch
      %186 = sbr.rel (%p183) target = $region36
    $region35: #{_lambda_.1} parent=5 // pred_region
      %s187 = ssub.s32 %s10, 1
      %p188 = scmp.lt.s32.totalorder %s19, 1
      %s189 = scalar_select %p188, %s19, 1
      %p190 = scmp.lt.s32.totalorder %s20, 0
      %s191 = scalar_select %p190, %s20, 0
      %s192 = smul.addr %s191, 2
      %s193 = smul.addr %s189, 2
      %s194 = sadd.s32 %s192, %s193
      %s195 = smul.addr %s194, 4
      %s196 = scalar_lea.vmem %s0, %s195
      %p197 = pneg %p50
      %p198 = pneg %p47
      %p199 = pneg %p71
      %p200 = pneg %p68
      %p201 = pneg %p92
      %p202 = pneg %p89
      %p203 = pneg %p113
      %p204 = pneg %p110
      %p205 = pneg %p141
      %p206 = pneg %p138
      %p207 = scmp.lt.s32.totalorder %s19, 1
      %s208 = scalar_select %p207, %s19, 1
      %p209 = scmp.lt.s32.totalorder %s20, 0
      %s210 = scalar_select %p209, %s20, 0
      %s211 = smul.addr %s208, 24
      %s212 = sadd.s32 %s210, %s211
      %s213 = smul.addr %s212, 4
      %s214 = scalar_lea.vmem %s4, %s213
      %p215 = scmp.lt.s32.totalorder %s19, 1
      %s216 = scalar_select %p215, %s19, 1
      %p217 = scmp.lt.s32.totalorder %s20, 0
      %s218 = scalar_select %p217, %s20, 0
      %s219 = smul.addr %s218, 2
      %s220 = smul.addr %s216, 2
      %s221 = sadd.s32 %s219, %s220
      %s222 = smul.addr %s221, 4
      %s223 = scalar_lea.vmem %s0, %s222
      %p224 = scmp.lt.s32.totalorder %s19, 1
      %s225 = scalar_select %p224, %s19, 1
      %p226 = scmp.lt.s32.totalorder %s20, 0
      %s227 = scalar_select %p226, %s20, 0
      %s228 = smul.addr %s225, 24
      %s229 = sadd.s32 %s227, %s228
      %s230 = smul.addr %s229, 4
      %s231 = scalar_lea.vmem %s4, %s230
      %v233 = vld [vmem:[%s223] sm:$0xf]
      %v234 = vld [vmem:[%s223 + $0x4] sm:$0x3]
      %v235 = vld [vmem:[%s1] sm:$0xf]
      %v236 = vld [vmem:[%s1 + $0x4] sm:$0xf]
      %v237 = vld [vmem:[%s1 + $0x8] sm:$0xf]
      %s238 = scalar_lea.vmem %s1, 12
      %v239 = vld [vmem:[%s238] sm:$0xf]
      %v240 = vld [vmem:[%s238 + $0x4] sm:$0xf]
      %v241 = vld [vmem:[%s238 + $0x8] sm:$0xf]
      %v245 = vunpack.c.l.b16 %v239
      %v246 = vunpack.c.l.b16 %v240
      %v247 = vunpack.c.l.b16 %v241
      %v248 = vpack.c.b16 %v246, %v245
      %v249 = vpack.c.b16 %v247, %v247
      %v252 = vunpack.c.l.b16 %v233
      %v253 = vunpack.c.l.b16 %v234
      %v254 = vpack.c.b16 %v253, %v252
      %255 = vrot.lane.b32.xlu0 %v254, 127
      %v256 = vpop.permute.xlu0 %255
      %vm257 = vcmask 97280
      %v259 = vsel %vm257, %v248, 0
      %v262 = vsel %vm257, %v249, 0
      %vm264 = vcmask 1045504
      %v266 = vsel %vm264, %v256, 0
      %268 = vmatprep.subr.bf16.mxu0 0
      %269 = vmatpush1.bf16.msra.mxu0 0
      %270 = vmatprep.subr.bf16.mxu0 0
      %271 = vmatpush1.bf16.msra.mxu0 0
      %272 = vmatprep.subr.bf16.mxu0 0
      %273 = vmatpush1.bf16.msra.mxu0 0
      %274 = vmatprep.subr.bf16.mxu0 0
      %275 = vmatpush1.bf16.msra.mxu0 0
      %276 = vmatprep.subr.bf16.mxu0 0
      %277 = vmatpush1.bf16.msra.mxu0 0
      %278 = vmatprep.subr.bf16.mxu0 0
      %279 = vmatpush1.bf16.msra.mxu0 0
      %280 = vmatprep.subr.bf16.mxu0 0
      %281 = vmatpush1.bf16.msra.mxu0 0
      %282 = vmatprep.subr.bf16.mxu0 0
      %283 = vmatpush1.bf16.msra.mxu0 %v266
      %284 = vmatprep.subr.bf16.mxu0 0
      %285 = vmatpush2.bf16.msra.mxu0 0
      %286 = vmatprep.subr.bf16.mxu0 0
      %287 = vmatpush2.bf16.msra.mxu0 0
      %288 = vmatprep.subr.bf16.mxu0 0
      %289 = vmatpush2.bf16.msra.mxu0 0
      %290 = vmatprep.subr.bf16.mxu0 0
      %291 = vmatpush2.bf16.msra.mxu0 0
      %292 = vmatprep.subr.bf16.mxu0 0
      %293 = vmatpush2.bf16.msra.mxu0 0
      %294 = vmatprep.subr.bf16.mxu0 0
      %295 = vmatpush2.bf16.msra.mxu0 0
      %296 = vmatprep.subr.bf16.mxu0 0
      %297 = vmatpush2.bf16.msra.mxu0 0
      %298 = vmatprep.subr.bf16.mxu0 0
      %299 = vmatpush2.bf16.msra.mxu0 0
      %300 = vmatprep.mubr.bf16.mxu0 0
      %301 = vmatmul.mubr.bf16.gmra.mxu0 %v259
      %v302 = vpop.f32.mrf.mxu0
      %v303 = vadd.f32 0.0, %v302
      %v304 = vpop.f32.mrf.mxu0
      %v305 = vpop.f32.mrf.mxu0
      %v306 = vadd.f32 0.0, %v305
      %v307 = vpop.f32.mrf.mxu0
      %308 = vmatprep.mubr.bf16.mxu0 0
      %309 = vmatmul.mubr.bf16.gmra.mxu0 %v262
      %v310 = vpop.f32.mrf.mxu0
      %v311 = vadd.f32 0.0, %v310
      %v312 = vpop.f32.mrf.mxu0
      %v313 = vpop.f32.mrf.mxu0
      %v314 = vpop.f32.mrf.mxu0
      %315 = vdwg.mxu0
      %v319 = vunpack.c.l.b16 %v235
      %v320 = vunpack.c.l.b16 %v236
      %v321 = vunpack.c.l.b16 %v237
      %v322 = vpack.c.b16 %v320, %v319
      %v323 = vpack.c.b16 %v321, %v321
      %v325 = vsel %vm257, %v322, 0
      %v328 = vsel %vm257, %v323, 0
      %v331 = vsel %vm264, %v254, 0
      %333 = vmatprep.subr.bf16.mxu0 0
      %334 = vmatpush1.bf16.msra.mxu0 0
      %335 = vmatprep.subr.bf16.mxu0 0
      %336 = vmatpush1.bf16.msra.mxu0 0
      %337 = vmatprep.subr.bf16.mxu0 0
      %338 = vmatpush1.bf16.msra.mxu0 0
      %339 = vmatprep.subr.bf16.mxu0 0
      %340 = vmatpush1.bf16.msra.mxu0 0
      %341 = vmatprep.subr.bf16.mxu0 0
      %342 = vmatpush1.bf16.msra.mxu0 0
      %343 = vmatprep.subr.bf16.mxu0 0
      %344 = vmatpush1.bf16.msra.mxu0 0
      %345 = vmatprep.subr.bf16.mxu0 0
      %346 = vmatpush1.bf16.msra.mxu0 0
      %347 = vmatprep.subr.bf16.mxu0 0
      %348 = vmatpush1.bf16.msra.mxu0 %v331
      %349 = vmatprep.subr.bf16.mxu0 0
      %350 = vmatpush2.bf16.msra.mxu0 0
      %351 = vmatprep.subr.bf16.mxu0 0
      %352 = vmatpush2.bf16.msra.mxu0 0
      %353 = vmatprep.subr.bf16.mxu0 0
      %354 = vmatpush2.bf16.msra.mxu0 0
      %355 = vmatprep.subr.bf16.mxu0 0
      %356 = vmatpush2.bf16.msra.mxu0 0
      %357 = vmatprep.subr.bf16.mxu0 0
      %358 = vmatpush2.bf16.msra.mxu0 0
      %359 = vmatprep.subr.bf16.mxu0 0
      %360 = vmatpush2.bf16.msra.mxu0 0
      %361 = vmatprep.subr.bf16.mxu0 0
      %362 = vmatpush2.bf16.msra.mxu0 0
      %363 = vmatprep.subr.bf16.mxu0 0
      %364 = vmatpush2.bf16.msra.mxu0 0
      %365 = vmatprep.mubr.bf16.mxu0 0
      %366 = vmatmul.mubr.bf16.gmra.mxu0 %v325
      %v367 = vpop.f32.mrf.mxu0
      %v368 = vadd.f32 %v303, %v367
      %v369 = vpop.f32.mrf.mxu0
      %v370 = vpop.f32.mrf.mxu0
      %v371 = vadd.f32 %v306, %v370
      %v372 = vpop.f32.mrf.mxu0
      %373 = vmatprep.mubr.bf16.mxu0 0
      %374 = vmatmul.mubr.bf16.gmra.mxu0 %v328
      %v375 = vpop.f32.mrf.mxu0
      %v376 = vadd.f32 %v311, %v375
      %v377 = vpop.f32.mrf.mxu0
      %v378 = vpop.f32.mrf.mxu0
      %v379 = vpop.f32.mrf.mxu0
      %380 = vdwg.mxu0
      %s381 = scalar_lea.vmem %s1, 24
      %v382 = vld [vmem:[%s381] sm:$0xf]
      %v383 = vld [vmem:[%s381 + $0x4] sm:$0xf]
      %v384 = vld [vmem:[%s381 + $0x8] sm:$0xf]
      %v388 = vunpack.c.l.b16 %v382
      %v389 = vunpack.c.l.b16 %v383
      %v390 = vunpack.c.l.b16 %v384
      %v391 = vpack.c.b16 %v389, %v388
      %v392 = vpack.c.b16 %v390, %v390
      %393 = vrot.lane.b32.xlu0 %v254, 119
      %v394 = vpop.permute.xlu0 %393
      %v396 = vsel %vm257, %v391, 0
      %v399 = vsel %vm257, %v392, 0
      %v402 = vsel %vm264, %v394, 0
      %404 = vmatprep.subr.bf16.mxu0 0
      %405 = vmatpush1.bf16.msra.mxu0 0
      %406 = vmatprep.subr.bf16.mxu0 0
      %407 = vmatpush1.bf16.msra.mxu0 0
      %408 = vmatprep.subr.bf16.mxu0 0
      %409 = vmatpush1.bf16.msra.mxu0 0
      %410 = vmatprep.subr.bf16.mxu0 0
      %411 = vmatpush1.bf16.msra.mxu0 0
      %412 = vmatprep.subr.bf16.mxu0 0
      %413 = vmatpush1.bf16.msra.mxu0 0
      %414 = vmatprep.subr.bf16.mxu0 0
      %415 = vmatpush1.bf16.msra.mxu0 0
      %416 = vmatprep.subr.bf16.mxu0 0
      %417 = vmatpush1.bf16.msra.mxu0 0
      %418 = vmatprep.subr.bf16.mxu0 0
      %419 = vmatpush1.bf16.msra.mxu0 %v402
      %420 = vmatprep.subr.bf16.mxu0 0
      %421 = vmatpush2.bf16.msra.mxu0 0
      %422 = vmatprep.subr.bf16.mxu0 0
      %423 = vmatpush2.bf16.msra.mxu0 0
      %424 = vmatprep.subr.bf16.mxu0 0
      %425 = vmatpush2.bf16.msra.mxu0 0
      %426 = vmatprep.subr.bf16.mxu0 0
      %427 = vmatpush2.bf16.msra.mxu0 0
      %428 = vmatprep.subr.bf16.mxu0 0
      %429 = vmatpush2.bf16.msra.mxu0 0
      %430 = vmatprep.subr.bf16.mxu0 0
      %431 = vmatpush2.bf16.msra.mxu0 0
      %432 = vmatprep.subr.bf16.mxu0 0
      %433 = vmatpush2.bf16.msra.mxu0 0
      %434 = vmatprep.subr.bf16.mxu0 0
      %435 = vmatpush2.bf16.msra.mxu0 0
      %436 = vmatprep.mubr.bf16.mxu0 0
      %437 = vmatmul.mubr.bf16.gmra.mxu0 %v396
      %v438 = vpop.f32.mrf.mxu0
      %v439 = vadd.f32 0.0, %v438
      %v440 = vpop.f32.mrf.mxu0
      %v441 = vpop.f32.mrf.mxu0
      %v442 = vadd.f32 0.0, %v441
      %v443 = vpop.f32.mrf.mxu0
      %444 = vmatprep.mubr.bf16.mxu0 0
      %445 = vmatmul.mubr.bf16.gmra.mxu0 %v399
      %v446 = vpop.f32.mrf.mxu0
      %v447 = vadd.f32 0.0, %v446
      %v448 = vpop.f32.mrf.mxu0
      %v449 = vpop.f32.mrf.mxu0
      %v450 = vpop.f32.mrf.mxu0
      %451 = vdwg.mxu0
      %v452 = vadd.f32 %v368, %v439
      %v453 = vadd.f32 %v371, %v442
      %v454 = vadd.f32 %v376, %v447
      %s455 = scalar_lea.vmem %s1, 36
      %v456 = vld [vmem:[%s455] sm:$0xf]
      %v457 = vld [vmem:[%s455 + $0x4] sm:$0xf]
      %v458 = vld [vmem:[%s455 + $0x8] sm:$0xf]
      %v462 = vunpack.c.l.b16 %v456
      %v463 = vunpack.c.l.b16 %v457
      %v464 = vunpack.c.l.b16 %v458
      %v465 = vpack.c.b16 %v463, %v462
      %v466 = vpack.c.b16 %v464, %v464
      %467 = vrot.lane.b32.xlu0 %v254, 118
      %v468 = vpop.permute.xlu0 %467
      %v470 = vsel %vm257, %v465, 0
      %v473 = vsel %vm257, %v466, 0
      %v476 = vsel %vm264, %v468, 0
      %478 = vmatprep.subr.bf16.mxu0 0
      %479 = vmatpush1.bf16.msra.mxu0 0
      %480 = vmatprep.subr.bf16.mxu0 0
      %481 = vmatpush1.bf16.msra.mxu0 0
      %482 = vmatprep.subr.bf16.mxu0 0
      %483 = vmatpush1.bf16.msra.mxu0 0
      %484 = vmatprep.subr.bf16.mxu0 0
      %485 = vmatpush1.bf16.msra.mxu0 0
      %486 = vmatprep.subr.bf16.mxu0 0
      %487 = vmatpush1.bf16.msra.mxu0 0
      %488 = vmatprep.subr.bf16.mxu0 0
      %489 = vmatpush1.bf16.msra.mxu0 0
      %490 = vmatprep.subr.bf16.mxu0 0
      %491 = vmatpush1.bf16.msra.mxu0 0
      %492 = vmatprep.subr.bf16.mxu0 0
      %493 = vmatpush1.bf16.msra.mxu0 %v476
      %494 = vmatprep.subr.bf16.mxu0 0
      %495 = vmatpush2.bf16.msra.mxu0 0
      %496 = vmatprep.subr.bf16.mxu0 0
      %497 = vmatpush2.bf16.msra.mxu0 0
      %498 = vmatprep.subr.bf16.mxu0 0
      %499 = vmatpush2.bf16.msra.mxu0 0
      %500 = vmatprep.subr.bf16.mxu0 0
      %501 = vmatpush2.bf16.msra.mxu0 0
      %502 = vmatprep.subr.bf16.mxu0 0
      %503 = vmatpush2.bf16.msra.mxu0 0
      %504 = vmatprep.subr.bf16.mxu0 0
      %505 = vmatpush2.bf16.msra.mxu0 0
      %506 = vmatprep.subr.bf16.mxu0 0
      %507 = vmatpush2.bf16.msra.mxu0 0
      %508 = vmatprep.subr.bf16.mxu0 0
      %509 = vmatpush2.bf16.msra.mxu0 0
      %510 = vmatprep.mubr.bf16.mxu0 0
      %511 = vmatmul.mubr.bf16.gmra.mxu0 %v470
      %v512 = vpop.f32.mrf.mxu0
      %v513 = vadd.f32 0.0, %v512
      %v514 = vpop.f32.mrf.mxu0
      %v515 = vpop.f32.mrf.mxu0
      %v516 = vadd.f32 0.0, %v515
      %v517 = vpop.f32.mrf.mxu0
      %518 = vmatprep.mubr.bf16.mxu0 0
      %519 = vmatmul.mubr.bf16.gmra.mxu0 %v473
      %v520 = vpop.f32.mrf.mxu0
      %v521 = vadd.f32 0.0, %v520
      %v522 = vpop.f32.mrf.mxu0
      %v523 = vpop.f32.mrf.mxu0
      %v524 = vpop.f32.mrf.mxu0
      %525 = vdwg.mxu0
      %v526 = vadd.f32 %v452, %v513
      %v527 = vadd.f32 %v453, %v516
      %v528 = vadd.f32 %v454, %v521
      %v529 = vld [vmem:[%s2] sm:$0xff]
      %v530 = vld [vmem:[%s2 + $0x8] sm:$0xff]
      %v531 = vld [vmem:[%s2 + $0x10] sm:$0xff]
      %533 = vset.pattern.permute.xlu0 0
      %534 = vperm.xlu0 %533, %v529
      %v535 = vpop.permute.xlu0 %534
      %538 = vset.pattern.permute.xlu0 0
      %539 = vperm.xlu0 %538, %v530
      %v540 = vpop.permute.xlu0 %539
      %543 = vset.pattern.permute.xlu0 0
      %544 = vperm.xlu0 %543, %v531
      %v545 = vpop.permute.xlu0 %544
      %v547 = vmul.f32 %v526, %v535
      %v548 = vmul.f32 %v527, %v540
      %v549 = vmul.f32 %v528, %v545
      %v550 = vld [vmem:[%s3] sm:$0xff]
      %v551 = vld [vmem:[%s3 + $0x8] sm:$0xff]
      %v552 = vld [vmem:[%s3 + $0x10] sm:$0xff]
      %554 = vset.pattern.permute.xlu0 0
      %555 = vperm.xlu0 %554, %v550
      %v556 = vpop.permute.xlu0 %555
      %559 = vset.pattern.permute.xlu0 0
      %560 = vperm.xlu0 %559, %v551
      %v561 = vpop.permute.xlu0 %560
      %564 = vset.pattern.permute.xlu0 0
      %565 = vperm.xlu0 %564, %v552
      %v566 = vpop.permute.xlu0 %565
      %v568 = vadd.f32 %v547, %v556
      %v569 = vadd.f32 %v548, %v561
      %v570 = vadd.f32 %v549, %v566
      %v571 = vxor.u32 %v568, 2147483648
      %v572 = vxor.u32 %v569, 2147483648
      %v573 = vxor.u32 %v570, 2147483648
      %v574 = vmul.f32 %v571, 1.442695
      %v575 = vpow.pop %v574
      %v576 = vmul.f32 %v572, 1.442695
      %v577 = vpow.pop %v576
      %v578 = vmul.f32 %v573, 1.442695
      %v579 = vpow.pop %v578
      %v580 = vadd.f32 %v575, 1.0
      %v581 = vadd.f32 %v577, 1.0
      %v582 = vadd.f32 %v579, 1.0
      %v583 = vrcp.pop %v580
      %v584 = vmul.f32 1.0, %v583
      %v585 = vrcp.pop %v581
      %v586 = vmul.f32 1.0, %v585
      %v587 = vrcp.pop %v582
      %v588 = vmul.f32 1.0, %v587
      %v589 = vmul.f32 %v568, %v584
      %v590 = vmul.f32 %v569, %v586
      %v591 = vmul.f32 %v570, %v588
      %v592 = vpack.c.bf16 %v590, %v589
      %v593 = vpack.c.bf16 %v591, %v591
      %v596 = vcombine.high %v592, %v592
      %v598 = vunpack.c.l.s4 1966171168
      %v599 = vunpack.c.0.s8 %v598
      %v600 = vlaneseq
      %v601 = vshrl.u32 %v600, 7
      %v602 = vsub.s32 %v599, %v601
      %v603 = vrot.slane %v592, %v602
      %v605 = vunpack.c.l.s4 1966171168
      %v606 = vunpack.c.0.s8 %v605
      %v607 = vlaneseq
      %v608 = vshrl.u32 %v607, 7
      %v609 = vsub.s32 %v606, %v608
      %v610 = vrot.slane %v596, %v609
      %v611 = vcombine.high %v603, %v603
      %v612 = vcombine.high %v610, %v610
      %v614 = vunpack.c.l.s4 1966171168
      %v615 = vunpack.c.0.s8 %v614
      %v616 = vlaneseq
      %v617 = vshrl.u32 %v616, 7
      %v618 = vsub.s32 %v615, %v617
      %v619 = vrot.slane %v603, %v618
      %v621 = vunpack.c.l.s4 1966171168
      %v622 = vunpack.c.0.s8 %v621
      %v623 = vlaneseq
      %v624 = vshrl.u32 %v623, 7
      %v625 = vsub.s32 %v622, %v624
      %v626 = vrot.slane %v610, %v625
      %v628 = vunpack.c.l.s4 1966171168
      %v629 = vunpack.c.0.s8 %v628
      %v630 = vlaneseq
      %v631 = vshrl.u32 %v630, 7
      %v632 = vsub.s32 %v629, %v631
      %v633 = vrot.slane %v611, %v632
      %v635 = vunpack.c.l.s4 1966171168
      %v636 = vunpack.c.0.s8 %v635
      %v637 = vlaneseq
      %v638 = vshrl.u32 %v637, 7
      %v639 = vsub.s32 %v636, %v638
      %v640 = vrot.slane %v612, %v639
      %v641 = vcombine.high %v619, %v619
      %v642 = vcombine.high %v626, %v626
      %v643 = vcombine.high %v633, %v633
      %v644 = vcombine.high %v640, %v640
      %v646 = vunpack.c.l.s4 1966171168
      %v647 = vunpack.c.0.s8 %v646
      %v648 = vlaneseq
      %v649 = vshrl.u32 %v648, 7
      %v650 = vsub.s32 %v647, %v649
      %v651 = vrot.slane %v593, %v650
      %v652 = vcombine.high %v651, %v651
      %v654 = vunpack.c.l.s4 1966171168
      %v655 = vunpack.c.0.s8 %v654
      %v656 = vlaneseq
      %v657 = vshrl.u32 %v656, 7
      %v658 = vsub.s32 %v655, %v657
      %v659 = vrot.slane %v651, %v658
      %v661 = vunpack.c.l.s4 1966171168
      %v662 = vunpack.c.0.s8 %v661
      %v663 = vlaneseq
      %v664 = vshrl.u32 %v663, 7
      %v665 = vsub.s32 %v662, %v664
      %v666 = vrot.slane %v652, %v665
      %v667 = vcombine.high %v659, %v659
      %v668 = vcombine.high %v666, %v666
      %v669 = vunpack.i.l.s16 %v619
      %v670 = vunpack.i.h.s16 %v619
      %v671 = vunpack.i.l.s16 %v633
      %v672 = vunpack.i.h.s16 %v633
      %v673 = vunpack.i.l.s16 %v641
      %v674 = vunpack.i.h.s16 %v641
      %v675 = vunpack.i.l.s16 %v643
      %v676 = vunpack.i.h.s16 %v643
      %v677 = vunpack.i.l.s16 %v626
      %v678 = vunpack.i.h.s16 %v626
      %v679 = vunpack.i.l.s16 %v640
      %v680 = vunpack.i.h.s16 %v640
      %v681 = vunpack.i.l.s16 %v642
      %v682 = vunpack.i.h.s16 %v642
      %v683 = vunpack.i.l.s16 %v644
      %v684 = vunpack.i.h.s16 %v644
      %v685 = vunpack.i.l.s16 %v659
      %v686 = vunpack.i.h.s16 %v659
      %v687 = vunpack.i.l.s16 %v666
      %v688 = vunpack.i.h.s16 %v666
      %v689 = vunpack.i.l.s16 %v667
      %v690 = vunpack.i.h.s16 %v667
      %v691 = vunpack.i.l.s16 %v668
      %v692 = vunpack.i.h.s16 %v668
      %v693 = vpack.i.b16 %v669, %v669
      %v694 = vpack.i.b16 %v670, %v670
      %v695 = vpack.i.b16 %v671, %v671
      %v696 = vpack.i.b16 %v672, %v672
      %v697 = vpack.i.b16 %v673, %v673
      %v698 = vpack.i.b16 %v674, %v674
      %v699 = vpack.i.b16 %v675, %v675
      %v700 = vpack.i.b16 %v676, %v676
      %v701 = vpack.i.b16 %v677, %v677
      %v702 = vpack.i.b16 %v678, %v678
      %v703 = vpack.i.b16 %v679, %v679
      %v704 = vpack.i.b16 %v680, %v680
      %v705 = vpack.i.b16 %v681, %v681
      %v706 = vpack.i.b16 %v682, %v682
      %v707 = vpack.i.b16 %v683, %v683
      %v708 = vpack.i.b16 %v684, %v684
      %v709 = vpack.i.b16 %v685, %v685
      %v710 = vpack.i.b16 %v686, %v686
      %v711 = vpack.i.b16 %v687, %v687
      %v712 = vpack.i.b16 %v688, %v688
      %v713 = vpack.i.b16 %v689, %v689
      %v714 = vpack.i.b16 %v690, %v690
      %v715 = vpack.i.b16 %v691, %v691
      %v716 = vpack.i.b16 %v692, %v692
      %v718 = vunpack.c.l.s4 286326784
      %v719 = vunpack.c.0.s8 %v718
      %v720 = vlaneseq
      %v721 = vshrl.u32 %v720, 7
      %v722 = vsub.s32 %v719, %v721
      %v723 = vrot.slane %v693, %v722
      %v725 = vunpack.c.l.s4 286326784
      %v726 = vunpack.c.0.s8 %v725
      %v727 = vlaneseq
      %v728 = vshrl.u32 %v727, 7
      %v729 = vsub.s32 %v726, %v728
      %v730 = vrot.slane %v694, %v729
      %v732 = vunpack.c.l.s4 286326784
      %v733 = vunpack.c.0.s8 %v732
      %v734 = vlaneseq
      %v735 = vshrl.u32 %v734, 7
      %v736 = vsub.s32 %v733, %v735
      %v737 = vrot.slane %v695, %v736
      %v739 = vunpack.c.l.s4 286326784
      %v740 = vunpack.c.0.s8 %v739
      %v741 = vlaneseq
      %v742 = vshrl.u32 %v741, 7
      %v743 = vsub.s32 %v740, %v742
      %v744 = vrot.slane %v696, %v743
      %v746 = vunpack.c.l.s4 286326784
      %v747 = vunpack.c.0.s8 %v746
      %v748 = vlaneseq
      %v749 = vshrl.u32 %v748, 7
      %v750 = vsub.s32 %v747, %v749
      %v751 = vrot.slane %v697, %v750
      %v753 = vunpack.c.l.s4 286326784
      %v754 = vunpack.c.0.s8 %v753
      %v755 = vlaneseq
      %v756 = vshrl.u32 %v755, 7
      %v757 = vsub.s32 %v754, %v756
      %v758 = vrot.slane %v698, %v757
      %v760 = vunpack.c.l.s4 286326784
      %v761 = vunpack.c.0.s8 %v760
      %v762 = vlaneseq
      %v763 = vshrl.u32 %v762, 7
      %v764 = vsub.s32 %v761, %v763
      %v765 = vrot.slane %v699, %v764
      %v767 = vunpack.c.l.s4 286326784
      %v768 = vunpack.c.0.s8 %v767
      %v769 = vlaneseq
      %v770 = vshrl.u32 %v769, 7
      %v771 = vsub.s32 %v768, %v770
      %v772 = vrot.slane %v700, %v771
      %v774 = vunpack.c.l.s4 286326784
      %v775 = vunpack.c.0.s8 %v774
      %v776 = vlaneseq
      %v777 = vshrl.u32 %v776, 7
      %v778 = vsub.s32 %v775, %v777
      %v779 = vrot.slane %v701, %v778
      %v781 = vunpack.c.l.s4 286326784
      %v782 = vunpack.c.0.s8 %v781
      %v783 = vlaneseq
      %v784 = vshrl.u32 %v783, 7
      %v785 = vsub.s32 %v782, %v784
      %v786 = vrot.slane %v702, %v785
      %v788 = vunpack.c.l.s4 286326784
      %v789 = vunpack.c.0.s8 %v788
      %v790 = vlaneseq
      %v791 = vshrl.u32 %v790, 7
      %v792 = vsub.s32 %v789, %v791
      %v793 = vrot.slane %v703, %v792
      %v795 = vunpack.c.l.s4 286326784
      %v796 = vunpack.c.0.s8 %v795
      %v797 = vlaneseq
      %v798 = vshrl.u32 %v797, 7
      %v799 = vsub.s32 %v796, %v798
      %v800 = vrot.slane %v704, %v799
      %v802 = vunpack.c.l.s4 286326784
      %v803 = vunpack.c.0.s8 %v802
      %v804 = vlaneseq
      %v805 = vshrl.u32 %v804, 7
      %v806 = vsub.s32 %v803, %v805
      %v807 = vrot.slane %v705, %v806
      %v809 = vunpack.c.l.s4 286326784
      %v810 = vunpack.c.0.s8 %v809
      %v811 = vlaneseq
      %v812 = vshrl.u32 %v811, 7
      %v813 = vsub.s32 %v810, %v812
      %v814 = vrot.slane %v706, %v813
      %v816 = vunpack.c.l.s4 286326784
      %v817 = vunpack.c.0.s8 %v816
      %v818 = vlaneseq
      %v819 = vshrl.u32 %v818, 7
      %v820 = vsub.s32 %v817, %v819
      %v821 = vrot.slane %v707, %v820
      %v823 = vunpack.c.l.s4 286326784
      %v824 = vunpack.c.0.s8 %v823
      %v825 = vlaneseq
      %v826 = vshrl.u32 %v825, 7
      %v827 = vsub.s32 %v824, %v826
      %v828 = vrot.slane %v708, %v827
      %v830 = vunpack.c.l.s4 286326784
      %v831 = vunpack.c.0.s8 %v830
      %v832 = vlaneseq
      %v833 = vshrl.u32 %v832, 7
      %v834 = vsub.s32 %v831, %v833
      %v835 = vrot.slane %v709, %v834
      %v837 = vunpack.c.l.s4 286326784
      %v838 = vunpack.c.0.s8 %v837
      %v839 = vlaneseq
      %v840 = vshrl.u32 %v839, 7
      %v841 = vsub.s32 %v838, %v840
      %v842 = vrot.slane %v710, %v841
      %v844 = vunpack.c.l.s4 286326784
      %v845 = vunpack.c.0.s8 %v844
      %v846 = vlaneseq
      %v847 = vshrl.u32 %v846, 7
      %v848 = vsub.s32 %v845, %v847
      %v849 = vrot.slane %v711, %v848
      %v851 = vunpack.c.l.s4 286326784
      %v852 = vunpack.c.0.s8 %v851
      %v853 = vlaneseq
      %v854 = vshrl.u32 %v853, 7
      %v855 = vsub.s32 %v852, %v854
      %v856 = vrot.slane %v712, %v855
      %v858 = vunpack.c.l.s4 286326784
      %v859 = vunpack.c.0.s8 %v858
      %v860 = vlaneseq
      %v861 = vshrl.u32 %v860, 7
      %v862 = vsub.s32 %v859, %v861
      %v863 = vrot.slane %v713, %v862
      %v865 = vunpack.c.l.s4 286326784
      %v866 = vunpack.c.0.s8 %v865
      %v867 = vlaneseq
      %v868 = vshrl.u32 %v867, 7
      %v869 = vsub.s32 %v866, %v868
      %v870 = vrot.slane %v714, %v869
      %v872 = vunpack.c.l.s4 286326784
      %v873 = vunpack.c.0.s8 %v872
      %v874 = vlaneseq
      %v875 = vshrl.u32 %v874, 7
      %v876 = vsub.s32 %v873, %v875
      %v877 = vrot.slane %v715, %v876
      %v879 = vunpack.c.l.s4 286326784
      %v880 = vunpack.c.0.s8 %v879
      %v881 = vlaneseq
      %v882 = vshrl.u32 %v881, 7
      %v883 = vsub.s32 %v880, %v882
      %v884 = vrot.slane %v716, %v883
      %vm909 = vcmask 57344
      %vm910 = vsmask.f32 256
      %vm911 = vmand %vm909, %vm910
      %v912 = vld [vmem:[%s231] sm:$0x1]
      %v913 = vsel %vm911, %v723, %v912
      %914 = vst [vmem:[%s231] sm:$0x1] %v913
      %v915 = vld [vmem:[%s231 + $0x4] sm:$0x1]
      %v916 = vsel %vm911, %v730, %v915
      %917 = vst [vmem:[%s231 + $0x4] sm:$0x1] %v916
      %v918 = vld [vmem:[%s231 + $0x8] sm:$0x1]
      %v919 = vsel %vm911, %v737, %v918
      %920 = vst [vmem:[%s231 + $0x8] sm:$0x1] %v919
      %v921 = vld [vmem:[%s231 + $0xc] sm:$0x1]
      %v922 = vsel %vm911, %v744, %v921
      %923 = vst [vmem:[%s231 + $0xc] sm:$0x1] %v922
      %v924 = vld [vmem:[%s231 + $0x10] sm:$0x1]
      %v925 = vsel %vm911, %v751, %v924
      %926 = vst [vmem:[%s231 + $0x10] sm:$0x1] %v925
      %v927 = vld [vmem:[%s231 + $0x14] sm:$0x1]
      %v928 = vsel %vm911, %v758, %v927
      %929 = vst [vmem:[%s231 + $0x14] sm:$0x1] %v928
      %v930 = vld [vmem:[%s231 + $0x18] sm:$0x1]
      %v931 = vsel %vm911, %v765, %v930
      %932 = vst [vmem:[%s231 + $0x18] sm:$0x1] %v931
      %v933 = vld [vmem:[%s231 + $0x1c] sm:$0x1]
      %v934 = vsel %vm911, %v772, %v933
      %935 = vst [vmem:[%s231 + $0x1c] sm:$0x1] %v934
      %v936 = vld [vmem:[%s231 + $0x20] sm:$0x1]
      %v937 = vsel %vm911, %v779, %v936
      %938 = vst [vmem:[%s231 + $0x20] sm:$0x1] %v937
      %v939 = vld [vmem:[%s231 + $0x24] sm:$0x1]
      %v940 = vsel %vm911, %v786, %v939
      %941 = vst [vmem:[%s231 + $0x24] sm:$0x1] %v940
      %v942 = vld [vmem:[%s231 + $0x28] sm:$0x1]
      %v943 = vsel %vm911, %v793, %v942
      %944 = vst [vmem:[%s231 + $0x28] sm:$0x1] %v943
      %v945 = vld [vmem:[%s231 + $0x2c] sm:$0x1]
      %v946 = vsel %vm911, %v800, %v945
      %947 = vst [vmem:[%s231 + $0x2c] sm:$0x1] %v946
      %v948 = vld [vmem:[%s231 + $0x30] sm:$0x1]
      %v949 = vsel %vm911, %v807, %v948
      %950 = vst [vmem:[%s231 + $0x30] sm:$0x1] %v949
      %v951 = vld [vmem:[%s231 + $0x34] sm:$0x1]
      %v952 = vsel %vm911, %v814, %v951
      %953 = vst [vmem:[%s231 + $0x34] sm:$0x1] %v952
      %v954 = vld [vmem:[%s231 + $0x38] sm:$0x1]
      %v955 = vsel %vm911, %v821, %v954
      %956 = vst [vmem:[%s231 + $0x38] sm:$0x1] %v955
      %v957 = vld [vmem:[%s231 + $0x3c] sm:$0x1]
      %v958 = vsel %vm911, %v828, %v957
      %959 = vst [vmem:[%s231 + $0x3c] sm:$0x1] %v958
      %v960 = vld [vmem:[%s231 + $0x40] sm:$0x1]
      %v961 = vsel %vm911, %v835, %v960
      %962 = vst [vmem:[%s231 + $0x40] sm:$0x1] %v961
      %v963 = vld [vmem:[%s231 + $0x44] sm:$0x1]
      %v964 = vsel %vm911, %v842, %v963
      %965 = vst [vmem:[%s231 + $0x44] sm:$0x1] %v964
      %v966 = vld [vmem:[%s231 + $0x48] sm:$0x1]
      %v967 = vsel %vm911, %v849, %v966
      %968 = vst [vmem:[%s231 + $0x48] sm:$0x1] %v967
      %v969 = vld [vmem:[%s231 + $0x4c] sm:$0x1]
      %v970 = vsel %vm911, %v856, %v969
      %971 = vst [vmem:[%s231 + $0x4c] sm:$0x1] %v970
      %v972 = vld [vmem:[%s231 + $0x50] sm:$0x1]
      %v973 = vsel %vm911, %v863, %v972
      %974 = vst [vmem:[%s231 + $0x50] sm:$0x1] %v973
      %v975 = vld [vmem:[%s231 + $0x54] sm:$0x1]
      %v976 = vsel %vm911, %v870, %v975
      %977 = vst [vmem:[%s231 + $0x54] sm:$0x1] %v976
      %v978 = vld [vmem:[%s231 + $0x58] sm:$0x1]
      %v979 = vsel %vm911, %v877, %v978
      %980 = vst [vmem:[%s231 + $0x58] sm:$0x1] %v979
      %v981 = vld [vmem:[%s231 + $0x5c] sm:$0x1]
      %v982 = vsel %vm911, %v884, %v981
      %983 = vst [vmem:[%s231 + $0x5c] sm:$0x1] %v982
      %984 = vrot.lane.b32.xlu0 %v723, 119
      %v985 = vpop.permute.xlu0 %984
      %986 = vrot.lane.b32.xlu0 %v730, 119
      %v987 = vpop.permute.xlu0 %986
      %988 = vrot.lane.b32.xlu0 %v737, 119
      %v989 = vpop.permute.xlu0 %988
      %990 = vrot.lane.b32.xlu0 %v744, 119
      %v991 = vpop.permute.xlu0 %990
      %992 = vrot.lane.b32.xlu0 %v751, 119
      %v993 = vpop.permute.xlu0 %992
      %994 = vrot.lane.b32.xlu0 %v758, 119
      %v995 = vpop.permute.xlu0 %994
      %996 = vrot.lane.b32.xlu0 %v765, 119
      %v997 = vpop.permute.xlu0 %996
      %998 = vrot.lane.b32.xlu0 %v772, 119
      %v999 = vpop.permute.xlu0 %998
      %1000 = vrot.lane.b32.xlu0 %v779, 119
      %v1001 = vpop.permute.xlu0 %1000
      %1002 = vrot.lane.b32.xlu0 %v786, 119
      %v1003 = vpop.permute.xlu0 %1002
      %1004 = vrot.lane.b32.xlu0 %v793, 119
      %v1005 = vpop.permute.xlu0 %1004
      %1006 = vrot.lane.b32.xlu0 %v800, 119
      %v1007 = vpop.permute.xlu0 %1006
      %1008 = vrot.lane.b32.xlu0 %v807, 119
      %v1009 = vpop.permute.xlu0 %1008
      %1010 = vrot.lane.b32.xlu0 %v814, 119
      %v1011 = vpop.permute.xlu0 %1010
      %1012 = vrot.lane.b32.xlu0 %v821, 119
      %v1013 = vpop.permute.xlu0 %1012
      %1014 = vrot.lane.b32.xlu0 %v828, 119
      %v1015 = vpop.permute.xlu0 %1014
      %1016 = vrot.lane.b32.xlu0 %v835, 119
      %v1017 = vpop.permute.xlu0 %1016
      %1018 = vrot.lane.b32.xlu0 %v842, 119
      %v1019 = vpop.permute.xlu0 %1018
      %1020 = vrot.lane.b32.xlu0 %v849, 119
      %v1021 = vpop.permute.xlu0 %1020
      %1022 = vrot.lane.b32.xlu0 %v856, 119
      %v1023 = vpop.permute.xlu0 %1022
      %1024 = vrot.lane.b32.xlu0 %v863, 119
      %v1025 = vpop.permute.xlu0 %1024
      %1026 = vrot.lane.b32.xlu0 %v870, 119
      %v1027 = vpop.permute.xlu0 %1026
      %1028 = vrot.lane.b32.xlu0 %v877, 119
      %v1029 = vpop.permute.xlu0 %1028
      %1030 = vrot.lane.b32.xlu0 %v884, 119
      %v1031 = vpop.permute.xlu0 %1030
      %vm1056 = vsmask.f32 7938
      %vm1057 = vmand %vm909, %vm1056
      %v1058 = vld [vmem:[%s231] sm:$0x1]
      %v1059 = vsel %vm1057, %v985, %v1058
      %1060 = vst [vmem:[%s231] sm:$0x1] %v1059
      %v1061 = vld [vmem:[%s231 + $0x4] sm:$0x1]
      %v1062 = vsel %vm1057, %v987, %v1061
      %1063 = vst [vmem:[%s231 + $0x4] sm:$0x1] %v1062
      %v1064 = vld [vmem:[%s231 + $0x8] sm:$0x1]
      %v1065 = vsel %vm1057, %v989, %v1064
      %1066 = vst [vmem:[%s231 + $0x8] sm:$0x1] %v1065
      %v1067 = vld [vmem:[%s231 + $0xc] sm:$0x1]
      %v1068 = vsel %vm1057, %v991, %v1067
      %1069 = vst [vmem:[%s231 + $0xc] sm:$0x1] %v1068
      %v1070 = vld [vmem:[%s231 + $0x10] sm:$0x1]
      %v1071 = vsel %vm1057, %v993, %v1070
      %1072 = vst [vmem:[%s231 + $0x10] sm:$0x1] %v1071
      %v1073 = vld [vmem:[%s231 + $0x14] sm:$0x1]
      %v1074 = vsel %vm1057, %v995, %v1073
      %1075 = vst [vmem:[%s231 + $0x14] sm:$0x1] %v1074
      %v1076 = vld [vmem:[%s231 + $0x18] sm:$0x1]
      %v1077 = vsel %vm1057, %v997, %v1076
      %1078 = vst [vmem:[%s231 + $0x18] sm:$0x1] %v1077
      %v1079 = vld [vmem:[%s231 + $0x1c] sm:$0x1]
      %v1080 = vsel %vm1057, %v999, %v1079
      %1081 = vst [vmem:[%s231 + $0x1c] sm:$0x1] %v1080
      %v1082 = vld [vmem:[%s231 + $0x20] sm:$0x1]
      %v1083 = vsel %vm1057, %v1001, %v1082
      %1084 = vst [vmem:[%s231 + $0x20] sm:$0x1] %v1083
      %v1085 = vld [vmem:[%s231 + $0x24] sm:$0x1]
      %v1086 = vsel %vm1057, %v1003, %v1085
      %1087 = vst [vmem:[%s231 + $0x24] sm:$0x1] %v1086
      %v1088 = vld [vmem:[%s231 + $0x28] sm:$0x1]
      %v1089 = vsel %vm1057, %v1005, %v1088
      %1090 = vst [vmem:[%s231 + $0x28] sm:$0x1] %v1089
      %v1091 = vld [vmem:[%s231 + $0x2c] sm:$0x1]
      %v1092 = vsel %vm1057, %v1007, %v1091
      %1093 = vst [vmem:[%s231 + $0x2c] sm:$0x1] %v1092
      %v1094 = vld [vmem:[%s231 + $0x30] sm:$0x1]
      %v1095 = vsel %vm1057, %v1009, %v1094
      %1096 = vst [vmem:[%s231 + $0x30] sm:$0x1] %v1095
      %v1097 = vld [vmem:[%s231 + $0x34] sm:$0x1]
      %v1098 = vsel %vm1057, %v1011, %v1097
      %1099 = vst [vmem:[%s231 + $0x34] sm:$0x1] %v1098
      %v1100 = vld [vmem:[%s231 + $0x38] sm:$0x1]
      %v1101 = vsel %vm1057, %v1013, %v1100
      %1102 = vst [vmem:[%s231 + $0x38] sm:$0x1] %v1101
      %v1103 = vld [vmem:[%s231 + $0x3c] sm:$0x1]
      %v1104 = vsel %vm1057, %v1015, %v1103
      %1105 = vst [vmem:[%s231 + $0x3c] sm:$0x1] %v1104
      %v1106 = vld [vmem:[%s231 + $0x40] sm:$0x1]
      %v1107 = vsel %vm1057, %v1017, %v1106
      %1108 = vst [vmem:[%s231 + $0x40] sm:$0x1] %v1107
      %v1109 = vld [vmem:[%s231 + $0x44] sm:$0x1]
      %v1110 = vsel %vm1057, %v1019, %v1109
      %1111 = vst [vmem:[%s231 + $0x44] sm:$0x1] %v1110
      %v1112 = vld [vmem:[%s231 + $0x48] sm:$0x1]
      %v1113 = vsel %vm1057, %v1021, %v1112
      %1114 = vst [vmem:[%s231 + $0x48] sm:$0x1] %v1113
      %v1115 = vld [vmem:[%s231 + $0x4c] sm:$0x1]
      %v1116 = vsel %vm1057, %v1023, %v1115
      %1117 = vst [vmem:[%s231 + $0x4c] sm:$0x1] %v1116
      %v1118 = vld [vmem:[%s231 + $0x50] sm:$0x1]
      %v1119 = vsel %vm1057, %v1025, %v1118
      %1120 = vst [vmem:[%s231 + $0x50] sm:$0x1] %v1119
      %v1121 = vld [vmem:[%s231 + $0x54] sm:$0x1]
      %v1122 = vsel %vm1057, %v1027, %v1121
      %1123 = vst [vmem:[%s231 + $0x54] sm:$0x1] %v1122
      %v1124 = vld [vmem:[%s231 + $0x58] sm:$0x1]
      %v1125 = vsel %vm1057, %v1029, %v1124
      %1126 = vst [vmem:[%s231 + $0x58] sm:$0x1] %v1125
      %v1127 = vld [vmem:[%s231 + $0x5c] sm:$0x1]
      %v1128 = vsel %vm1057, %v1031, %v1127
      %1129 = vst [vmem:[%s231 + $0x5c] sm:$0x1] %v1128
      %1130 = vrot.lane.b32.xlu0 %v723, 110
      %v1131 = vpop.permute.xlu0 %1130
      %1132 = vrot.lane.b32.xlu0 %v730, 110
      %v1133 = vpop.permute.xlu0 %1132
      %1134 = vrot.lane.b32.xlu0 %v737, 110
      %v1135 = vpop.permute.xlu0 %1134
      %1136 = vrot.lane.b32.xlu0 %v744, 110
      %v1137 = vpop.permute.xlu0 %1136
      %1138 = vrot.lane.b32.xlu0 %v751, 110
      %v1139 = vpop.permute.xlu0 %1138
      %1140 = vrot.lane.b32.xlu0 %v758, 110
      %v1141 = vpop.permute.xlu0 %1140
      %1142 = vrot.lane.b32.xlu0 %v765, 110
      %v1143 = vpop.permute.xlu0 %1142
      %1144 = vrot.lane.b32.xlu0 %v772, 110
      %v1145 = vpop.permute.xlu0 %1144
      %1146 = vrot.lane.b32.xlu0 %v779, 110
      %v1147 = vpop.permute.xlu0 %1146
      %1148 = vrot.lane.b32.xlu0 %v786, 110
      %v1149 = vpop.permute.xlu0 %1148
      %1150 = vrot.lane.b32.xlu0 %v793, 110
      %v1151 = vpop.permute.xlu0 %1150
      %1152 = vrot.lane.b32.xlu0 %v800, 110
      %v1153 = vpop.permute.xlu0 %1152
      %1154 = vrot.lane.b32.xlu0 %v807, 110
      %v1155 = vpop.permute.xlu0 %1154
      %1156 = vrot.lane.b32.xlu0 %v814, 110
      %v1157 = vpop.permute.xlu0 %1156
      %1158 = vrot.lane.b32.xlu0 %v821, 110
      %v1159 = vpop.permute.xlu0 %1158
      %1160 = vrot.lane.b32.xlu0 %v828, 110
      %v1161 = vpop.permute.xlu0 %1160
      %1162 = vrot.lane.b32.xlu0 %v835, 110
      %v1163 = vpop.permute.xlu0 %1162
      %1164 = vrot.lane.b32.xlu0 %v842, 110
      %v1165 = vpop.permute.xlu0 %1164
      %1166 = vrot.lane.b32.xlu0 %v849, 110
      %v1167 = vpop.permute.xlu0 %1166
      %1168 = vrot.lane.b32.xlu0 %v856, 110
      %v1169 = vpop.permute.xlu0 %1168
      %1170 = vrot.lane.b32.xlu0 %v863, 110
      %v1171 = vpop.permute.xlu0 %1170
      %1172 = vrot.lane.b32.xlu0 %v870, 110
      %v1173 = vpop.permute.xlu0 %1172
      %1174 = vrot.lane.b32.xlu0 %v877, 110
      %v1175 = vpop.permute.xlu0 %1174
      %1176 = vrot.lane.b32.xlu0 %v884, 110
      %v1177 = vpop.permute.xlu0 %1176
      %vm1202 = vcmask 58369
      %vm1203 = vsmask.f32 1280
      %vm1204 = vmand %vm1202, %vm1203
      %v1205 = vld [vmem:[%s231] sm:$0x2]
      %v1206 = vsel %vm1204, %v1131, %v1205
      %1207 = vst [vmem:[%s231] sm:$0x2] %v1206
      %v1208 = vld [vmem:[%s231 + $0x4] sm:$0x2]
      %v1209 = vsel %vm1204, %v1133, %v1208
      %1210 = vst [vmem:[%s231 + $0x4] sm:$0x2] %v1209
      %v1211 = vld [vmem:[%s231 + $0x8] sm:$0x2]
      %v1212 = vsel %vm1204, %v1135, %v1211
      %1213 = vst [vmem:[%s231 + $0x8] sm:$0x2] %v1212
      %v1214 = vld [vmem:[%s231 + $0xc] sm:$0x2]
      %v1215 = vsel %vm1204, %v1137, %v1214
      %1216 = vst [vmem:[%s231 + $0xc] sm:$0x2] %v1215
      %v1217 = vld [vmem:[%s231 + $0x10] sm:$0x2]
      %v1218 = vsel %vm1204, %v1139, %v1217
      %1219 = vst [vmem:[%s231 + $0x10] sm:$0x2] %v1218
      %v1220 = vld [vmem:[%s231 + $0x14] sm:$0x2]
      %v1221 = vsel %vm1204, %v1141, %v1220
      %1222 = vst [vmem:[%s231 + $0x14] sm:$0x2] %v1221
      %v1223 = vld [vmem:[%s231 + $0x18] sm:$0x2]
      %v1224 = vsel %vm1204, %v1143, %v1223
      %1225 = vst [vmem:[%s231 + $0x18] sm:$0x2] %v1224
      %v1226 = vld [vmem:[%s231 + $0x1c] sm:$0x2]
      %v1227 = vsel %vm1204, %v1145, %v1226
      %1228 = vst [vmem:[%s231 + $0x1c] sm:$0x2] %v1227
      %v1229 = vld [vmem:[%s231 + $0x20] sm:$0x2]
      %v1230 = vsel %vm1204, %v1147, %v1229
      %1231 = vst [vmem:[%s231 + $0x20] sm:$0x2] %v1230
      %v1232 = vld [vmem:[%s231 + $0x24] sm:$0x2]
      %v1233 = vsel %vm1204, %v1149, %v1232
      %1234 = vst [vmem:[%s231 + $0x24] sm:$0x2] %v1233
      %v1235 = vld [vmem:[%s231 + $0x28] sm:$0x2]
      %v1236 = vsel %vm1204, %v1151, %v1235
      %1237 = vst [vmem:[%s231 + $0x28] sm:$0x2] %v1236
      %v1238 = vld [vmem:[%s231 + $0x2c] sm:$0x2]
      %v1239 = vsel %vm1204, %v1153, %v1238
      %1240 = vst [vmem:[%s231 + $0x2c] sm:$0x2] %v1239
      %v1241 = vld [vmem:[%s231 + $0x30] sm:$0x2]
      %v1242 = vsel %vm1204, %v1155, %v1241
      %1243 = vst [vmem:[%s231 + $0x30] sm:$0x2] %v1242
      %v1244 = vld [vmem:[%s231 + $0x34] sm:$0x2]
      %v1245 = vsel %vm1204, %v1157, %v1244
      %1246 = vst [vmem:[%s231 + $0x34] sm:$0x2] %v1245
      %v1247 = vld [vmem:[%s231 + $0x38] sm:$0x2]
      %v1248 = vsel %vm1204, %v1159, %v1247
      %1249 = vst [vmem:[%s231 + $0x38] sm:$0x2] %v1248
      %v1250 = vld [vmem:[%s231 + $0x3c] sm:$0x2]
      %v1251 = vsel %vm1204, %v1161, %v1250
      %1252 = vst [vmem:[%s231 + $0x3c] sm:$0x2] %v1251
      %v1253 = vld [vmem:[%s231 + $0x40] sm:$0x2]
      %v1254 = vsel %vm1204, %v1163, %v1253
      %1255 = vst [vmem:[%s231 + $0x40] sm:$0x2] %v1254
      %v1256 = vld [vmem:[%s231 + $0x44] sm:$0x2]
      %v1257 = vsel %vm1204, %v1165, %v1256
      %1258 = vst [vmem:[%s231 + $0x44] sm:$0x2] %v1257
      %v1259 = vld [vmem:[%s231 + $0x48] sm:$0x2]
      %v1260 = vsel %vm1204, %v1167, %v1259
      %1261 = vst [vmem:[%s231 + $0x48] sm:$0x2] %v1260
      %v1262 = vld [vmem:[%s231 + $0x4c] sm:$0x2]
      %v1263 = vsel %vm1204, %v1169, %v1262
      %1264 = vst [vmem:[%s231 + $0x4c] sm:$0x2] %v1263
      %v1265 = vld [vmem:[%s231 + $0x50] sm:$0x2]
      %v1266 = vsel %vm1204, %v1171, %v1265
      %1267 = vst [vmem:[%s231 + $0x50] sm:$0x2] %v1266
      %v1268 = vld [vmem:[%s231 + $0x54] sm:$0x2]
      %v1269 = vsel %vm1204, %v1173, %v1268
      %1270 = vst [vmem:[%s231 + $0x54] sm:$0x2] %v1269
      %v1271 = vld [vmem:[%s231 + $0x58] sm:$0x2]
      %v1272 = vsel %vm1204, %v1175, %v1271
      %1273 = vst [vmem:[%s231 + $0x58] sm:$0x2] %v1272
      %v1274 = vld [vmem:[%s231 + $0x5c] sm:$0x2]
      %v1275 = vsel %vm1204, %v1177, %v1274
      %1276 = vst [vmem:[%s231 + $0x5c] sm:$0x2] %v1275
      %1277 = vrot.lane.b32.xlu0 %v723, 101
      %v1278 = vpop.permute.xlu0 %1277
      %1279 = vrot.lane.b32.xlu0 %v730, 101
      %v1280 = vpop.permute.xlu0 %1279
      %1281 = vrot.lane.b32.xlu0 %v737, 101
      %v1282 = vpop.permute.xlu0 %1281
      %1283 = vrot.lane.b32.xlu0 %v744, 101
      %v1284 = vpop.permute.xlu0 %1283
      %1285 = vrot.lane.b32.xlu0 %v751, 101
      %v1286 = vpop.permute.xlu0 %1285
      %1287 = vrot.lane.b32.xlu0 %v758, 101
      %v1288 = vpop.permute.xlu0 %1287
      %1289 = vrot.lane.b32.xlu0 %v765, 101
      %v1290 = vpop.permute.xlu0 %1289
      %1291 = vrot.lane.b32.xlu0 %v772, 101
      %v1292 = vpop.permute.xlu0 %1291
      %1293 = vrot.lane.b32.xlu0 %v779, 101
      %v1294 = vpop.permute.xlu0 %1293
      %1295 = vrot.lane.b32.xlu0 %v786, 101
      %v1296 = vpop.permute.xlu0 %1295
      %1297 = vrot.lane.b32.xlu0 %v793, 101
      %v1298 = vpop.permute.xlu0 %1297
      %1299 = vrot.lane.b32.xlu0 %v800, 101
      %v1300 = vpop.permute.xlu0 %1299
      %1301 = vrot.lane.b32.xlu0 %v807, 101
      %v1302 = vpop.permute.xlu0 %1301
      %1303 = vrot.lane.b32.xlu0 %v814, 101
      %v1304 = vpop.permute.xlu0 %1303
      %1305 = vrot.lane.b32.xlu0 %v821, 101
      %v1306 = vpop.permute.xlu0 %1305
      %1307 = vrot.lane.b32.xlu0 %v828, 101
      %v1308 = vpop.permute.xlu0 %1307
      %1309 = vrot.lane.b32.xlu0 %v835, 101
      %v1310 = vpop.permute.xlu0 %1309
      %1311 = vrot.lane.b32.xlu0 %v842, 101
      %v1312 = vpop.permute.xlu0 %1311
      %1313 = vrot.lane.b32.xlu0 %v849, 101
      %v1314 = vpop.permute.xlu0 %1313
      %1315 = vrot.lane.b32.xlu0 %v856, 101
      %v1316 = vpop.permute.xlu0 %1315
      %1317 = vrot.lane.b32.xlu0 %v863, 101
      %v1318 = vpop.permute.xlu0 %1317
      %1319 = vrot.lane.b32.xlu0 %v870, 101
      %v1320 = vpop.permute.xlu0 %1319
      %1321 = vrot.lane.b32.xlu0 %v877, 101
      %v1322 = vpop.permute.xlu0 %1321
      %1323 = vrot.lane.b32.xlu0 %v884, 101
      %v1324 = vpop.permute.xlu0 %1323
      %vm1349 = vsmask.f32 7942
      %vm1350 = vmand %vm1202, %vm1349
      %v1351 = vld [vmem:[%s231] sm:$0x2]
      %v1352 = vsel %vm1350, %v1278, %v1351
      %1353 = vst [vmem:[%s231] sm:$0x2] %v1352
      %v1354 = vld [vmem:[%s231 + $0x4] sm:$0x2]
      %v1355 = vsel %vm1350, %v1280, %v1354
      %1356 = vst [vmem:[%s231 + $0x4] sm:$0x2] %v1355
      %v1357 = vld [vmem:[%s231 + $0x8] sm:$0x2]
      %v1358 = vsel %vm1350, %v1282, %v1357
      %1359 = vst [vmem:[%s231 + $0x8] sm:$0x2] %v1358
      %v1360 = vld [vmem:[%s231 + $0xc] sm:$0x2]
      %v1361 = vsel %vm1350, %v1284, %v1360
      %1362 = vst [vmem:[%s231 + $0xc] sm:$0x2] %v1361
      %v1363 = vld [vmem:[%s231 + $0x10] sm:$0x2]
      %v1364 = vsel %vm1350, %v1286, %v1363
      %1365 = vst [vmem:[%s231 + $0x10] sm:$0x2] %v1364
      %v1366 = vld [vmem:[%s231 + $0x14] sm:$0x2]
      %v1367 = vsel %vm1350, %v1288, %v1366
      %1368 = vst [vmem:[%s231 + $0x14] sm:$0x2] %v1367
      %v1369 = vld [vmem:[%s231 + $0x18] sm:$0x2]
      %v1370 = vsel %vm1350, %v1290, %v1369
      %1371 = vst [vmem:[%s231 + $0x18] sm:$0x2] %v1370
      %v1372 = vld [vmem:[%s231 + $0x1c] sm:$0x2]
      %v1373 = vsel %vm1350, %v1292, %v1372
      %1374 = vst [vmem:[%s231 + $0x1c] sm:$0x2] %v1373
      %v1375 = vld [vmem:[%s231 + $0x20] sm:$0x2]
      %v1376 = vsel %vm1350, %v1294, %v1375
      %1377 = vst [vmem:[%s231 + $0x20] sm:$0x2] %v1376
      %v1378 = vld [vmem:[%s231 + $0x24] sm:$0x2]
      %v1379 = vsel %vm1350, %v1296, %v1378
      %1380 = vst [vmem:[%s231 + $0x24] sm:$0x2] %v1379
      %v1381 = vld [vmem:[%s231 + $0x28] sm:$0x2]
      %v1382 = vsel %vm1350, %v1298, %v1381
      %1383 = vst [vmem:[%s231 + $0x28] sm:$0x2] %v1382
      %v1384 = vld [vmem:[%s231 + $0x2c] sm:$0x2]
      %v1385 = vsel %vm1350, %v1300, %v1384
      %1386 = vst [vmem:[%s231 + $0x2c] sm:$0x2] %v1385
      %v1387 = vld [vmem:[%s231 + $0x30] sm:$0x2]
      %v1388 = vsel %vm1350, %v1302, %v1387
      %1389 = vst [vmem:[%s231 + $0x30] sm:$0x2] %v1388
      %v1390 = vld [vmem:[%s231 + $0x34] sm:$0x2]
      %v1391 = vsel %vm1350, %v1304, %v1390
      %1392 = vst [vmem:[%s231 + $0x34] sm:$0x2] %v1391
      %v1393 = vld [vmem:[%s231 + $0x38] sm:$0x2]
      %v1394 = vsel %vm1350, %v1306, %v1393
      %1395 = vst [vmem:[%s231 + $0x38] sm:$0x2] %v1394
      %v1396 = vld [vmem:[%s231 + $0x3c] sm:$0x2]
      %v1397 = vsel %vm1350, %v1308, %v1396
      %1398 = vst [vmem:[%s231 + $0x3c] sm:$0x2] %v1397
      %v1399 = vld [vmem:[%s231 + $0x40] sm:$0x2]
      %v1400 = vsel %vm1350, %v1310, %v1399
      %1401 = vst [vmem:[%s231 + $0x40] sm:$0x2] %v1400
      %v1402 = vld [vmem:[%s231 + $0x44] sm:$0x2]
      %v1403 = vsel %vm1350, %v1312, %v1402
      %1404 = vst [vmem:[%s231 + $0x44] sm:$0x2] %v1403
      %v1405 = vld [vmem:[%s231 + $0x48] sm:$0x2]
      %v1406 = vsel %vm1350, %v1314, %v1405
      %1407 = vst [vmem:[%s231 + $0x48] sm:$0x2] %v1406
      %v1408 = vld [vmem:[%s231 + $0x4c] sm:$0x2]
      %v1409 = vsel %vm1350, %v1316, %v1408
      %1410 = vst [vmem:[%s231 + $0x4c] sm:$0x2] %v1409
      %v1411 = vld [vmem:[%s231 + $0x50] sm:$0x2]
      %v1412 = vsel %vm1350, %v1318, %v1411
      %1413 = vst [vmem:[%s231 + $0x50] sm:$0x2] %v1412
      %v1414 = vld [vmem:[%s231 + $0x54] sm:$0x2]
      %v1415 = vsel %vm1350, %v1320, %v1414
      %1416 = vst [vmem:[%s231 + $0x54] sm:$0x2] %v1415
      %v1417 = vld [vmem:[%s231 + $0x58] sm:$0x2]
      %v1418 = vsel %vm1350, %v1322, %v1417
      %1419 = vst [vmem:[%s231 + $0x58] sm:$0x2] %v1418
      %v1420 = vld [vmem:[%s231 + $0x5c] sm:$0x2]
      %v1421 = vsel %vm1350, %v1324, %v1420
      %1422 = vst [vmem:[%s231 + $0x5c] sm:$0x2] %v1421
      %1423 = vrot.lane.b32.xlu0 %v723, 92
      %v1424 = vpop.permute.xlu0 %1423
      %1425 = vrot.lane.b32.xlu0 %v730, 92
      %v1426 = vpop.permute.xlu0 %1425
      %1427 = vrot.lane.b32.xlu0 %v737, 92
      %v1428 = vpop.permute.xlu0 %1427
      %1429 = vrot.lane.b32.xlu0 %v744, 92
      %v1430 = vpop.permute.xlu0 %1429
      %1431 = vrot.lane.b32.xlu0 %v751, 92
      %v1432 = vpop.permute.xlu0 %1431
      %1433 = vrot.lane.b32.xlu0 %v758, 92
      %v1434 = vpop.permute.xlu0 %1433
      %1435 = vrot.lane.b32.xlu0 %v765, 92
      %v1436 = vpop.permute.xlu0 %1435
      %1437 = vrot.lane.b32.xlu0 %v772, 92
      %v1438 = vpop.permute.xlu0 %1437
      %1439 = vrot.lane.b32.xlu0 %v779, 92
      %v1440 = vpop.permute.xlu0 %1439
      %1441 = vrot.lane.b32.xlu0 %v786, 92
      %v1442 = vpop.permute.xlu0 %1441
      %1443 = vrot.lane.b32.xlu0 %v793, 92
      %v1444 = vpop.permute.xlu0 %1443
      %1445 = vrot.lane.b32.xlu0 %v800, 92
      %v1446 = vpop.permute.xlu0 %1445
      %1447 = vrot.lane.b32.xlu0 %v807, 92
      %v1448 = vpop.permute.xlu0 %1447
      %1449 = vrot.lane.b32.xlu0 %v814, 92
      %v1450 = vpop.permute.xlu0 %1449
      %1451 = vrot.lane.b32.xlu0 %v821, 92
      %v1452 = vpop.permute.xlu0 %1451
      %1453 = vrot.lane.b32.xlu0 %v828, 92
      %v1454 = vpop.permute.xlu0 %1453
      %1455 = vrot.lane.b32.xlu0 %v835, 92
      %v1456 = vpop.permute.xlu0 %1455
      %1457 = vrot.lane.b32.xlu0 %v842, 92
      %v1458 = vpop.permute.xlu0 %1457
      %1459 = vrot.lane.b32.xlu0 %v849, 92
      %v1460 = vpop.permute.xlu0 %1459
      %1461 = vrot.lane.b32.xlu0 %v856, 92
      %v1462 = vpop.permute.xlu0 %1461
      %1463 = vrot.lane.b32.xlu0 %v863, 92
      %v1464 = vpop.permute.xlu0 %1463
      %1465 = vrot.lane.b32.xlu0 %v870, 92
      %v1466 = vpop.permute.xlu0 %1465
      %1467 = vrot.lane.b32.xlu0 %v877, 92
      %v1468 = vpop.permute.xlu0 %1467
      %1469 = vrot.lane.b32.xlu0 %v884, 92
      %v1470 = vpop.permute.xlu0 %1469
      %vm1495 = vcmask 59394
      %vm1496 = vsmask.f32 2304
      %vm1497 = vmand %vm1495, %vm1496
      %v1498 = vld [vmem:[%s231] sm:$0x4]
      %v1499 = vsel %vm1497, %v1424, %v1498
      %1500 = vst [vmem:[%s231] sm:$0x4] %v1499
      %v1501 = vld [vmem:[%s231 + $0x4] sm:$0x4]
      %v1502 = vsel %vm1497, %v1426, %v1501
      %1503 = vst [vmem:[%s231 + $0x4] sm:$0x4] %v1502
      %v1504 = vld [vmem:[%s231 + $0x8] sm:$0x4]
      %v1505 = vsel %vm1497, %v1428, %v1504
      %1506 = vst [vmem:[%s231 + $0x8] sm:$0x4] %v1505
      %v1507 = vld [vmem:[%s231 + $0xc] sm:$0x4]
      %v1508 = vsel %vm1497, %v1430, %v1507
      %1509 = vst [vmem:[%s231 + $0xc] sm:$0x4] %v1508
      %v1510 = vld [vmem:[%s231 + $0x10] sm:$0x4]
      %v1511 = vsel %vm1497, %v1432, %v1510
      %1512 = vst [vmem:[%s231 + $0x10] sm:$0x4] %v1511
      %v1513 = vld [vmem:[%s231 + $0x14] sm:$0x4]
      %v1514 = vsel %vm1497, %v1434, %v1513
      %1515 = vst [vmem:[%s231 + $0x14] sm:$0x4] %v1514
      %v1516 = vld [vmem:[%s231 + $0x18] sm:$0x4]
      %v1517 = vsel %vm1497, %v1436, %v1516
      %1518 = vst [vmem:[%s231 + $0x18] sm:$0x4] %v1517
      %v1519 = vld [vmem:[%s231 + $0x1c] sm:$0x4]
      %v1520 = vsel %vm1497, %v1438, %v1519
      %1521 = vst [vmem:[%s231 + $0x1c] sm:$0x4] %v1520
      %v1522 = vld [vmem:[%s231 + $0x20] sm:$0x4]
      %v1523 = vsel %vm1497, %v1440, %v1522
      %1524 = vst [vmem:[%s231 + $0x20] sm:$0x4] %v1523
      %v1525 = vld [vmem:[%s231 + $0x24] sm:$0x4]
      %v1526 = vsel %vm1497, %v1442, %v1525
      %1527 = vst [vmem:[%s231 + $0x24] sm:$0x4] %v1526
      %v1528 = vld [vmem:[%s231 + $0x28] sm:$0x4]
      %v1529 = vsel %vm1497, %v1444, %v1528
      %1530 = vst [vmem:[%s231 + $0x28] sm:$0x4] %v1529
      %v1531 = vld [vmem:[%s231 + $0x2c] sm:$0x4]
      %v1532 = vsel %vm1497, %v1446, %v1531
      %1533 = vst [vmem:[%s231 + $0x2c] sm:$0x4] %v1532
      %v1534 = vld [vmem:[%s231 + $0x30] sm:$0x4]
      %v1535 = vsel %vm1497, %v1448, %v1534
      %1536 = vst [vmem:[%s231 + $0x30] sm:$0x4] %v1535
      %v1537 = vld [vmem:[%s231 + $0x34] sm:$0x4]
      %v1538 = vsel %vm1497, %v1450, %v1537
      %1539 = vst [vmem:[%s231 + $0x34] sm:$0x4] %v1538
      %v1540 = vld [vmem:[%s231 + $0x38] sm:$0x4]
      %v1541 = vsel %vm1497, %v1452, %v1540
      %1542 = vst [vmem:[%s231 + $0x38] sm:$0x4] %v1541
      %v1543 = vld [vmem:[%s231 + $0x3c] sm:$0x4]
      %v1544 = vsel %vm1497, %v1454, %v1543
      %1545 = vst [vmem:[%s231 + $0x3c] sm:$0x4] %v1544
      %v1546 = vld [vmem:[%s231 + $0x40] sm:$0x4]
      %v1547 = vsel %vm1497, %v1456, %v1546
      %1548 = vst [vmem:[%s231 + $0x40] sm:$0x4] %v1547
      %v1549 = vld [vmem:[%s231 + $0x44] sm:$0x4]
      %v1550 = vsel %vm1497, %v1458, %v1549
      %1551 = vst [vmem:[%s231 + $0x44] sm:$0x4] %v1550
      %v1552 = vld [vmem:[%s231 + $0x48] sm:$0x4]
      %v1553 = vsel %vm1497, %v1460, %v1552
      %1554 = vst [vmem:[%s231 + $0x48] sm:$0x4] %v1553
      %v1555 = vld [vmem:[%s231 + $0x4c] sm:$0x4]
      %v1556 = vsel %vm1497, %v1462, %v1555
      %1557 = vst [vmem:[%s231 + $0x4c] sm:$0x4] %v1556
      %v1558 = vld [vmem:[%s231 + $0x50] sm:$0x4]
      %v1559 = vsel %vm1497, %v1464, %v1558
      %1560 = vst [vmem:[%s231 + $0x50] sm:$0x4] %v1559
      %v1561 = vld [vmem:[%s231 + $0x54] sm:$0x4]
      %v1562 = vsel %vm1497, %v1466, %v1561
      %1563 = vst [vmem:[%s231 + $0x54] sm:$0x4] %v1562
      %v1564 = vld [vmem:[%s231 + $0x58] sm:$0x4]
      %v1565 = vsel %vm1497, %v1468, %v1564
      %1566 = vst [vmem:[%s231 + $0x58] sm:$0x4] %v1565
      %v1567 = vld [vmem:[%s231 + $0x5c] sm:$0x4]
      %v1568 = vsel %vm1497, %v1470, %v1567
      %1569 = vst [vmem:[%s231 + $0x5c] sm:$0x4] %v1568
      %1570 = vrot.lane.b32.xlu0 %v723, 83
      %v1571 = vpop.permute.xlu0 %1570
      %1572 = vrot.lane.b32.xlu0 %v730, 83
      %v1573 = vpop.permute.xlu0 %1572
      %1574 = vrot.lane.b32.xlu0 %v737, 83
      %v1575 = vpop.permute.xlu0 %1574
      %1576 = vrot.lane.b32.xlu0 %v744, 83
      %v1577 = vpop.permute.xlu0 %1576
      %1578 = vrot.lane.b32.xlu0 %v751, 83
      %v1579 = vpop.permute.xlu0 %1578
      %1580 = vrot.lane.b32.xlu0 %v758, 83
      %v1581 = vpop.permute.xlu0 %1580
      %1582 = vrot.lane.b32.xlu0 %v765, 83
      %v1583 = vpop.permute.xlu0 %1582
      %1584 = vrot.lane.b32.xlu0 %v772, 83
      %v1585 = vpop.permute.xlu0 %1584
      %1586 = vrot.lane.b32.xlu0 %v779, 83
      %v1587 = vpop.permute.xlu0 %1586
      %1588 = vrot.lane.b32.xlu0 %v786, 83
      %v1589 = vpop.permute.xlu0 %1588
      %1590 = vrot.lane.b32.xlu0 %v793, 83
      %v1591 = vpop.permute.xlu0 %1590
      %1592 = vrot.lane.b32.xlu0 %v800, 83
      %v1593 = vpop.permute.xlu0 %1592
      %1594 = vrot.lane.b32.xlu0 %v807, 83
      %v1595 = vpop.permute.xlu0 %1594
      %1596 = vrot.lane.b32.xlu0 %v814, 83
      %v1597 = vpop.permute.xlu0 %1596
      %1598 = vrot.lane.b32.xlu0 %v821, 83
      %v1599 = vpop.permute.xlu0 %1598
      %1600 = vrot.lane.b32.xlu0 %v828, 83
      %v1601 = vpop.permute.xlu0 %1600
      %1602 = vrot.lane.b32.xlu0 %v835, 83
      %v1603 = vpop.permute.xlu0 %1602
      %1604 = vrot.lane.b32.xlu0 %v842, 83
      %v1605 = vpop.permute.xlu0 %1604
      %1606 = vrot.lane.b32.xlu0 %v849, 83
      %v1607 = vpop.permute.xlu0 %1606
      %1608 = vrot.lane.b32.xlu0 %v856, 83
      %v1609 = vpop.permute.xlu0 %1608
      %1610 = vrot.lane.b32.xlu0 %v863, 83
      %v1611 = vpop.permute.xlu0 %1610
      %1612 = vrot.lane.b32.xlu0 %v870, 83
      %v1613 = vpop.permute.xlu0 %1612
      %1614 = vrot.lane.b32.xlu0 %v877, 83
      %v1615 = vpop.permute.xlu0 %1614
      %1616 = vrot.lane.b32.xlu0 %v884, 83
      %v1617 = vpop.permute.xlu0 %1616
      %vm1642 = vsmask.f32 7946
      %vm1643 = vmand %vm1495, %vm1642
      %v1644 = vld [vmem:[%s231] sm:$0x4]
      %v1645 = vsel %vm1643, %v1571, %v1644
      %1646 = vst [vmem:[%s231] sm:$0x4] %v1645
      %v1647 = vld [vmem:[%s231 + $0x4] sm:$0x4]
      %v1648 = vsel %vm1643, %v1573, %v1647
      %1649 = vst [vmem:[%s231 + $0x4] sm:$0x4] %v1648
      %v1650 = vld [vmem:[%s231 + $0x8] sm:$0x4]
      %v1651 = vsel %vm1643, %v1575, %v1650
      %1652 = vst [vmem:[%s231 + $0x8] sm:$0x4] %v1651
      %v1653 = vld [vmem:[%s231 + $0xc] sm:$0x4]
      %v1654 = vsel %vm1643, %v1577, %v1653
      %1655 = vst [vmem:[%s231 + $0xc] sm:$0x4] %v1654
      %v1656 = vld [vmem:[%s231 + $0x10] sm:$0x4]
      %v1657 = vsel %vm1643, %v1579, %v1656
      %1658 = vst [vmem:[%s231 + $0x10] sm:$0x4] %v1657
      %v1659 = vld [vmem:[%s231 + $0x14] sm:$0x4]
      %v1660 = vsel %vm1643, %v1581, %v1659
      %1661 = vst [vmem:[%s231 + $0x14] sm:$0x4] %v1660
      %v1662 = vld [vmem:[%s231 + $0x18] sm:$0x4]
      %v1663 = vsel %vm1643, %v1583, %v1662
      %1664 = vst [vmem:[%s231 + $0x18] sm:$0x4] %v1663
      %v1665 = vld [vmem:[%s231 + $0x1c] sm:$0x4]
      %v1666 = vsel %vm1643, %v1585, %v1665
      %1667 = vst [vmem:[%s231 + $0x1c] sm:$0x4] %v1666
      %v1668 = vld [vmem:[%s231 + $0x20] sm:$0x4]
      %v1669 = vsel %vm1643, %v1587, %v1668
      %1670 = vst [vmem:[%s231 + $0x20] sm:$0x4] %v1669
      %v1671 = vld [vmem:[%s231 + $0x24] sm:$0x4]
      %v1672 = vsel %vm1643, %v1589, %v1671
      %1673 = vst [vmem:[%s231 + $0x24] sm:$0x4] %v1672
      %v1674 = vld [vmem:[%s231 + $0x28] sm:$0x4]
      %v1675 = vsel %vm1643, %v1591, %v1674
      %1676 = vst [vmem:[%s231 + $0x28] sm:$0x4] %v1675
      %v1677 = vld [vmem:[%s231 + $0x2c] sm:$0x4]
      %v1678 = vsel %vm1643, %v1593, %v1677
      %1679 = vst [vmem:[%s231 + $0x2c] sm:$0x4] %v1678
      %v1680 = vld [vmem:[%s231 + $0x30] sm:$0x4]
      %v1681 = vsel %vm1643, %v1595, %v1680
      %1682 = vst [vmem:[%s231 + $0x30] sm:$0x4] %v1681
      %v1683 = vld [vmem:[%s231 + $0x34] sm:$0x4]
      %v1684 = vsel %vm1643, %v1597, %v1683
      %1685 = vst [vmem:[%s231 + $0x34] sm:$0x4] %v1684
      %v1686 = vld [vmem:[%s231 + $0x38] sm:$0x4]
      %v1687 = vsel %vm1643, %v1599, %v1686
      %1688 = vst [vmem:[%s231 + $0x38] sm:$0x4] %v1687
      %v1689 = vld [vmem:[%s231 + $0x3c] sm:$0x4]
      %v1690 = vsel %vm1643, %v1601, %v1689
      %1691 = vst [vmem:[%s231 + $0x3c] sm:$0x4] %v1690
      %v1692 = vld [vmem:[%s231 + $0x40] sm:$0x4]
      %v1693 = vsel %vm1643, %v1603, %v1692
      %1694 = vst [vmem:[%s231 + $0x40] sm:$0x4] %v1693
      %v1695 = vld [vmem:[%s231 + $0x44] sm:$0x4]
      %v1696 = vsel %vm1643, %v1605, %v1695
      %1697 = vst [vmem:[%s231 + $0x44] sm:$0x4] %v1696
      %v1698 = vld [vmem:[%s231 + $0x48] sm:$0x4]
      %v1699 = vsel %vm1643, %v1607, %v1698
      %1700 = vst [vmem:[%s231 + $0x48] sm:$0x4] %v1699
      %v1701 = vld [vmem:[%s231 + $0x4c] sm:$0x4]
      %v1702 = vsel %vm1643, %v1609, %v1701
      %1703 = vst [vmem:[%s231 + $0x4c] sm:$0x4] %v1702
      %v1704 = vld [vmem:[%s231 + $0x50] sm:$0x4]
      %v1705 = vsel %vm1643, %v1611, %v1704
      %1706 = vst [vmem:[%s231 + $0x50] sm:$0x4] %v1705
      %v1707 = vld [vmem:[%s231 + $0x54] sm:$0x4]
      %v1708 = vsel %vm1643, %v1613, %v1707
      %1709 = vst [vmem:[%s231 + $0x54] sm:$0x4] %v1708
      %v1710 = vld [vmem:[%s231 + $0x58] sm:$0x4]
      %v1711 = vsel %vm1643, %v1615, %v1710
      %1712 = vst [vmem:[%s231 + $0x58] sm:$0x4] %v1711
      %v1713 = vld [vmem:[%s231 + $0x5c] sm:$0x4]
      %v1714 = vsel %vm1643, %v1617, %v1713
      %1715 = vst [vmem:[%s231 + $0x5c] sm:$0x4] %v1714
      %1716 = vrot.lane.b32.xlu0 %v723, 74
      %v1717 = vpop.permute.xlu0 %1716
      %1718 = vrot.lane.b32.xlu0 %v730, 74
      %v1719 = vpop.permute.xlu0 %1718
      %1720 = vrot.lane.b32.xlu0 %v737, 74
      %v1721 = vpop.permute.xlu0 %1720
      %1722 = vrot.lane.b32.xlu0 %v744, 74
      %v1723 = vpop.permute.xlu0 %1722
      %1724 = vrot.lane.b32.xlu0 %v751, 74
      %v1725 = vpop.permute.xlu0 %1724
      %1726 = vrot.lane.b32.xlu0 %v758, 74
      %v1727 = vpop.permute.xlu0 %1726
      %1728 = vrot.lane.b32.xlu0 %v765, 74
      %v1729 = vpop.permute.xlu0 %1728
      %1730 = vrot.lane.b32.xlu0 %v772, 74
      %v1731 = vpop.permute.xlu0 %1730
      %1732 = vrot.lane.b32.xlu0 %v779, 74
      %v1733 = vpop.permute.xlu0 %1732
      %1734 = vrot.lane.b32.xlu0 %v786, 74
      %v1735 = vpop.permute.xlu0 %1734
      %1736 = vrot.lane.b32.xlu0 %v793, 74
      %v1737 = vpop.permute.xlu0 %1736
      %1738 = vrot.lane.b32.xlu0 %v800, 74
      %v1739 = vpop.permute.xlu0 %1738
      %1740 = vrot.lane.b32.xlu0 %v807, 74
      %v1741 = vpop.permute.xlu0 %1740
      %1742 = vrot.lane.b32.xlu0 %v814, 74
      %v1743 = vpop.permute.xlu0 %1742
      %1744 = vrot.lane.b32.xlu0 %v821, 74
      %v1745 = vpop.permute.xlu0 %1744
      %1746 = vrot.lane.b32.xlu0 %v828, 74
      %v1747 = vpop.permute.xlu0 %1746
      %1748 = vrot.lane.b32.xlu0 %v835, 74
      %v1749 = vpop.permute.xlu0 %1748
      %1750 = vrot.lane.b32.xlu0 %v842, 74
      %v1751 = vpop.permute.xlu0 %1750
      %1752 = vrot.lane.b32.xlu0 %v849, 74
      %v1753 = vpop.permute.xlu0 %1752
      %1754 = vrot.lane.b32.xlu0 %v856, 74
      %v1755 = vpop.permute.xlu0 %1754
      %1756 = vrot.lane.b32.xlu0 %v863, 74
      %v1757 = vpop.permute.xlu0 %1756
      %1758 = vrot.lane.b32.xlu0 %v870, 74
      %v1759 = vpop.permute.xlu0 %1758
      %1760 = vrot.lane.b32.xlu0 %v877, 74
      %v1761 = vpop.permute.xlu0 %1760
      %1762 = vrot.lane.b32.xlu0 %v884, 74
      %v1763 = vpop.permute.xlu0 %1762
      %vm1788 = vcmask 60419
      %vm1789 = vsmask.f32 3328
      %vm1790 = vmand %vm1788, %vm1789
      %v1791 = vld [vmem:[%s231] sm:$0x8]
      %v1792 = vsel %vm1790, %v1717, %v1791
      %1793 = vst [vmem:[%s231] sm:$0x8] %v1792
      %v1794 = vld [vmem:[%s231 + $0x4] sm:$0x8]
      %v1795 = vsel %vm1790, %v1719, %v1794
      %1796 = vst [vmem:[%s231 + $0x4] sm:$0x8] %v1795
      %v1797 = vld [vmem:[%s231 + $0x8] sm:$0x8]
      %v1798 = vsel %vm1790, %v1721, %v1797
      %1799 = vst [vmem:[%s231 + $0x8] sm:$0x8] %v1798
      %v1800 = vld [vmem:[%s231 + $0xc] sm:$0x8]
      %v1801 = vsel %vm1790, %v1723, %v1800
      %1802 = vst [vmem:[%s231 + $0xc] sm:$0x8] %v1801
      %v1803 = vld [vmem:[%s231 + $0x10] sm:$0x8]
      %v1804 = vsel %vm1790, %v1725, %v1803
      %1805 = vst [vmem:[%s231 + $0x10] sm:$0x8] %v1804
      %v1806 = vld [vmem:[%s231 + $0x14] sm:$0x8]
      %v1807 = vsel %vm1790, %v1727, %v1806
      %1808 = vst [vmem:[%s231 + $0x14] sm:$0x8] %v1807
      %v1809 = vld [vmem:[%s231 + $0x18] sm:$0x8]
      %v1810 = vsel %vm1790, %v1729, %v1809
      %1811 = vst [vmem:[%s231 + $0x18] sm:$0x8] %v1810
      %v1812 = vld [vmem:[%s231 + $0x1c] sm:$0x8]
      %v1813 = vsel %vm1790, %v1731, %v1812
      %1814 = vst [vmem:[%s231 + $0x1c] sm:$0x8] %v1813
      %v1815 = vld [vmem:[%s231 + $0x20] sm:$0x8]
      %v1816 = vsel %vm1790, %v1733, %v1815
      %1817 = vst [vmem:[%s231 + $0x20] sm:$0x8] %v1816
      %v1818 = vld [vmem:[%s231 + $0x24] sm:$0x8]
      %v1819 = vsel %vm1790, %v1735, %v1818
      %1820 = vst [vmem:[%s231 + $0x24] sm:$0x8] %v1819
      %v1821 = vld [vmem:[%s231 + $0x28] sm:$0x8]
      %v1822 = vsel %vm1790, %v1737, %v1821
      %1823 = vst [vmem:[%s231 + $0x28] sm:$0x8] %v1822
      %v1824 = vld [vmem:[%s231 + $0x2c] sm:$0x8]
      %v1825 = vsel %vm1790, %v1739, %v1824
      %1826 = vst [vmem:[%s231 + $0x2c] sm:$0x8] %v1825
      %v1827 = vld [vmem:[%s231 + $0x30] sm:$0x8]
      %v1828 = vsel %vm1790, %v1741, %v1827
      %1829 = vst [vmem:[%s231 + $0x30] sm:$0x8] %v1828
      %v1830 = vld [vmem:[%s231 + $0x34] sm:$0x8]
      %v1831 = vsel %vm1790, %v1743, %v1830
      %1832 = vst [vmem:[%s231 + $0x34] sm:$0x8] %v1831
      %v1833 = vld [vmem:[%s231 + $0x38] sm:$0x8]
      %v1834 = vsel %vm1790, %v1745, %v1833
      %1835 = vst [vmem:[%s231 + $0x38] sm:$0x8] %v1834
      %v1836 = vld [vmem:[%s231 + $0x3c] sm:$0x8]
      %v1837 = vsel %vm1790, %v1747, %v1836
      %1838 = vst [vmem:[%s231 + $0x3c] sm:$0x8] %v1837
      %v1839 = vld [vmem:[%s231 + $0x40] sm:$0x8]
      %v1840 = vsel %vm1790, %v1749, %v1839
      %1841 = vst [vmem:[%s231 + $0x40] sm:$0x8] %v1840
      %v1842 = vld [vmem:[%s231 + $0x44] sm:$0x8]
      %v1843 = vsel %vm1790, %v1751, %v1842
      %1844 = vst [vmem:[%s231 + $0x44] sm:$0x8] %v1843
      %v1845 = vld [vmem:[%s231 + $0x48] sm:$0x8]
      %v1846 = vsel %vm1790, %v1753, %v1845
      %1847 = vst [vmem:[%s231 + $0x48] sm:$0x8] %v1846
      %v1848 = vld [vmem:[%s231 + $0x4c] sm:$0x8]
      %v1849 = vsel %vm1790, %v1755, %v1848
      %1850 = vst [vmem:[%s231 + $0x4c] sm:$0x8] %v1849
      %v1851 = vld [vmem:[%s231 + $0x50] sm:$0x8]
      %v1852 = vsel %vm1790, %v1757, %v1851
      %1853 = vst [vmem:[%s231 + $0x50] sm:$0x8] %v1852
      %v1854 = vld [vmem:[%s231 + $0x54] sm:$0x8]
      %v1855 = vsel %vm1790, %v1759, %v1854
      %1856 = vst [vmem:[%s231 + $0x54] sm:$0x8] %v1855
      %v1857 = vld [vmem:[%s231 + $0x58] sm:$0x8]
      %v1858 = vsel %vm1790, %v1761, %v1857
      %1859 = vst [vmem:[%s231 + $0x58] sm:$0x8] %v1858
      %v1860 = vld [vmem:[%s231 + $0x5c] sm:$0x8]
      %v1861 = vsel %vm1790, %v1763, %v1860
      %1862 = vst [vmem:[%s231 + $0x5c] sm:$0x8] %v1861
      %1863 = vrot.lane.b32.xlu0 %v723, 65
      %v1864 = vpop.permute.xlu0 %1863
      %1865 = vrot.lane.b32.xlu0 %v730, 65
      %v1866 = vpop.permute.xlu0 %1865
      %1867 = vrot.lane.b32.xlu0 %v737, 65
      %v1868 = vpop.permute.xlu0 %1867
      %1869 = vrot.lane.b32.xlu0 %v744, 65
      %v1870 = vpop.permute.xlu0 %1869
      %1871 = vrot.lane.b32.xlu0 %v751, 65
      %v1872 = vpop.permute.xlu0 %1871
      %1873 = vrot.lane.b32.xlu0 %v758, 65
      %v1874 = vpop.permute.xlu0 %1873
      %1875 = vrot.lane.b32.xlu0 %v765, 65
      %v1876 = vpop.permute.xlu0 %1875
      %1877 = vrot.lane.b32.xlu0 %v772, 65
      %v1878 = vpop.permute.xlu0 %1877
      %1879 = vrot.lane.b32.xlu0 %v779, 65
      %v1880 = vpop.permute.xlu0 %1879
      %1881 = vrot.lane.b32.xlu0 %v786, 65
      %v1882 = vpop.permute.xlu0 %1881
      %1883 = vrot.lane.b32.xlu0 %v793, 65
      %v1884 = vpop.permute.xlu0 %1883
      %1885 = vrot.lane.b32.xlu0 %v800, 65
      %v1886 = vpop.permute.xlu0 %1885
      %1887 = vrot.lane.b32.xlu0 %v807, 65
      %v1888 = vpop.permute.xlu0 %1887
      %1889 = vrot.lane.b32.xlu0 %v814, 65
      %v1890 = vpop.permute.xlu0 %1889
      %1891 = vrot.lane.b32.xlu0 %v821, 65
      %v1892 = vpop.permute.xlu0 %1891
      %1893 = vrot.lane.b32.xlu0 %v828, 65
      %v1894 = vpop.permute.xlu0 %1893
      %1895 = vrot.lane.b32.xlu0 %v835, 65
      %v1896 = vpop.permute.xlu0 %1895
      %1897 = vrot.lane.b32.xlu0 %v842, 65
      %v1898 = vpop.permute.xlu0 %1897
      %1899 = vrot.lane.b32.xlu0 %v849, 65
      %v1900 = vpop.permute.xlu0 %1899
      %1901 = vrot.lane.b32.xlu0 %v856, 65
      %v1902 = vpop.permute.xlu0 %1901
      %1903 = vrot.lane.b32.xlu0 %v863, 65
      %v1904 = vpop.permute.xlu0 %1903
      %1905 = vrot.lane.b32.xlu0 %v870, 65
      %v1906 = vpop.permute.xlu0 %1905
      %1907 = vrot.lane.b32.xlu0 %v877, 65
      %v1908 = vpop.permute.xlu0 %1907
      %1909 = vrot.lane.b32.xlu0 %v884, 65
      %v1910 = vpop.permute.xlu0 %1909
      %vm1935 = vsmask.f32 7950
      %vm1936 = vmand %vm1788, %vm1935
      %v1937 = vld [vmem:[%s231] sm:$0x8]
      %v1938 = vsel %vm1936, %v1864, %v1937
      %1939 = vst [vmem:[%s231] sm:$0x8] %v1938
      %v1940 = vld [vmem:[%s231 + $0x4] sm:$0x8]
      %v1941 = vsel %vm1936, %v1866, %v1940
      %1942 = vst [vmem:[%s231 + $0x4] sm:$0x8] %v1941
      %v1943 = vld [vmem:[%s231 + $0x8] sm:$0x8]
      %v1944 = vsel %vm1936, %v1868, %v1943
      %1945 = vst [vmem:[%s231 + $0x8] sm:$0x8] %v1944
      %v1946 = vld [vmem:[%s231 + $0xc] sm:$0x8]
      %v1947 = vsel %vm1936, %v1870, %v1946
      %1948 = vst [vmem:[%s231 + $0xc] sm:$0x8] %v1947
      %v1949 = vld [vmem:[%s231 + $0x10] sm:$0x8]
      %v1950 = vsel %vm1936, %v1872, %v1949
      %1951 = vst [vmem:[%s231 + $0x10] sm:$0x8] %v1950
      %v1952 = vld [vmem:[%s231 + $0x14] sm:$0x8]
      %v1953 = vsel %vm1936, %v1874, %v1952
      %1954 = vst [vmem:[%s231 + $0x14] sm:$0x8] %v1953
      %v1955 = vld [vmem:[%s231 + $0x18] sm:$0x8]
      %v1956 = vsel %vm1936, %v1876, %v1955
      %1957 = vst [vmem:[%s231 + $0x18] sm:$0x8] %v1956
      %v1958 = vld [vmem:[%s231 + $0x1c] sm:$0x8]
      %v1959 = vsel %vm1936, %v1878, %v1958
      %1960 = vst [vmem:[%s231 + $0x1c] sm:$0x8] %v1959
      %v1961 = vld [vmem:[%s231 + $0x20] sm:$0x8]
      %v1962 = vsel %vm1936, %v1880, %v1961
      %1963 = vst [vmem:[%s231 + $0x20] sm:$0x8] %v1962
      %v1964 = vld [vmem:[%s231 + $0x24] sm:$0x8]
      %v1965 = vsel %vm1936, %v1882, %v1964
      %1966 = vst [vmem:[%s231 + $0x24] sm:$0x8] %v1965
      %v1967 = vld [vmem:[%s231 + $0x28] sm:$0x8]
      %v1968 = vsel %vm1936, %v1884, %v1967
      %1969 = vst [vmem:[%s231 + $0x28] sm:$0x8] %v1968
      %v1970 = vld [vmem:[%s231 + $0x2c] sm:$0x8]
      %v1971 = vsel %vm1936, %v1886, %v1970
      %1972 = vst [vmem:[%s231 + $0x2c] sm:$0x8] %v1971
      %v1973 = vld [vmem:[%s231 + $0x30] sm:$0x8]
      %v1974 = vsel %vm1936, %v1888, %v1973
      %1975 = vst [vmem:[%s231 + $0x30] sm:$0x8] %v1974
      %v1976 = vld [vmem:[%s231 + $0x34] sm:$0x8]
      %v1977 = vsel %vm1936, %v1890, %v1976
      %1978 = vst [vmem:[%s231 + $0x34] sm:$0x8] %v1977
      %v1979 = vld [vmem:[%s231 + $0x38] sm:$0x8]
      %v1980 = vsel %vm1936, %v1892, %v1979
      %1981 = vst [vmem:[%s231 + $0x38] sm:$0x8] %v1980
      %v1982 = vld [vmem:[%s231 + $0x3c] sm:$0x8]
      %v1983 = vsel %vm1936, %v1894, %v1982
      %1984 = vst [vmem:[%s231 + $0x3c] sm:$0x8] %v1983
      %v1985 = vld [vmem:[%s231 + $0x40] sm:$0x8]
      %v1986 = vsel %vm1936, %v1896, %v1985
      %1987 = vst [vmem:[%s231 + $0x40] sm:$0x8] %v1986
      %v1988 = vld [vmem:[%s231 + $0x44] sm:$0x8]
      %v1989 = vsel %vm1936, %v1898, %v1988
      %1990 = vst [vmem:[%s231 + $0x44] sm:$0x8] %v1989
      %v1991 = vld [vmem:[%s231 + $0x48] sm:$0x8]
      %v1992 = vsel %vm1936, %v1900, %v1991
      %1993 = vst [vmem:[%s231 + $0x48] sm:$0x8] %v1992
      %v1994 = vld [vmem:[%s231 + $0x4c] sm:$0x8]
      %v1995 = vsel %vm1936, %v1902, %v1994
      %1996 = vst [vmem:[%s231 + $0x4c] sm:$0x8] %v1995
      %v1997 = vld [vmem:[%s231 + $0x50] sm:$0x8]
      %v1998 = vsel %vm1936, %v1904, %v1997
      %1999 = vst [vmem:[%s231 + $0x50] sm:$0x8] %v1998
      %v2000 = vld [vmem:[%s231 + $0x54] sm:$0x8]
      %v2001 = vsel %vm1936, %v1906, %v2000
      %2002 = vst [vmem:[%s231 + $0x54] sm:$0x8] %v2001
      %v2003 = vld [vmem:[%s231 + $0x58] sm:$0x8]
      %v2004 = vsel %vm1936, %v1908, %v2003
      %2005 = vst [vmem:[%s231 + $0x58] sm:$0x8] %v2004
      %v2006 = vld [vmem:[%s231 + $0x5c] sm:$0x8]
      %v2007 = vsel %vm1936, %v1910, %v2006
      %2008 = vst [vmem:[%s231 + $0x5c] sm:$0x8] %v2007
      %p2009 = scmp.lt.s32.totalorder %s19, 1
      %s2010 = scalar_select %p2009, %s19, 1
      %p2011 = scmp.lt.s32.totalorder %s20, 0
      %s2012 = scalar_select %p2011, %s20, 0
      %s2013 = smul.addr %s2010, 24
      %s2014 = sadd.s32 %s2012, %s2013
      %s2015 = smul.addr %s2014, 4
      %s2016 = scalar_lea.vmem %s4, %s2015
      // Predicated region
      $region37: #{_lambda_.1} parent=35 // pred_check
        %p2017 = pneg %p138
      $region38: #{_lambda_.1} parent=35 // pred_check_branch
        %2019 = sbr.rel (%p2017) target = $region40
      $region39: #{_lambda_.1} parent=35 // pred_region
        _
      $region40: #{_lambda_.1} parent=35 // pred_fallthru
        _
    $region36: #{_lambda_.1} parent=5 // pred_fallthru
      _
    %p2020 = scmp.le.s32.totalorder 2, %s10
    // Predicated region
    $region41: #{_lambda_.1} parent=5 // pred_check
      %p2021 = pneg %p2020
    $region42: #{_lambda_.1} parent=5 // pred_check_branch
      %2023 = sbr.rel (%p2021) target = $region44
    $region43: #{_lambda_.1} parent=5 // pred_region
      %s2024 = ssub.s32 %s10, 2
      // Predicated region
      $region45: #{_lambda_.1} parent=43 // pred_check
        %p2025 = pneg %p144
      $region46: #{_lambda_.1} parent=43 // pred_check_branch
        %2027 = sbr.rel (%p2025) target = $region48
      $region47: #{_lambda_.1} parent=43 // pred_region
        %p2028 = scmp.lt.s32.totalorder %s21, 1
        %s2029 = scalar_select %p2028, %s21, 1
        %p2030 = scmp.lt.s32.totalorder %s22, 0
        %s2031 = scalar_select %p2030, %s22, 0
        %s2032 = smul.addr %s2029, 24
        %s2033 = sadd.s32 %s2031, %s2032
        %s2034 = smul.addr %s2033, 4
        %s2035 = scalar_lea.vmem %s4, %s2034
      $region48: #{_lambda_.1} parent=43 // pred_fallthru
        _
    $region44: #{_lambda_.1} parent=5 // pred_fallthru
      _
  $region6: #{_lambda_.1} parent=0 // loop_footer
    %s14 = sadd.s32 1, %s10
  $region7: #{_lambda_.1} parent=0 // loop_footer_branch
    %9 = sbr.rel target = $region3
  $region8: #{_lambda_.1} parent=0 // loop_exit
    _

</llo_original>
